<compile_context>
chip_gen: v5e
topology: v5e:2x2
jax: 0.10.0
libtpu: 0.0.40
codegen_flags: <defaults>
</compile_context>

<pallas_src>
import numpy as np
import jax
import jax.numpy as jnp
from jax.experimental import pallas as pl
from jax.experimental.pallas import tpu as pltpu

BN_EPS = 1e-5


def _round_up(x, m):
    return (x + m - 1) // m * m


def _pad2d(a, rows, cols):
    return jnp.pad(a, ((0, rows - a.shape[0]), (0, cols - a.shape[1])))


def _choose_batch_tiling(B, batch_tile):
    """Pick (TB, padded_B, n_steps) with TB a multiple of 8.

    Prefers >= 2 grid steps (ideally an even count) so v7x's second TensorCore
    gets work from the "parallel" batch axis, without inflating padding.
    """
    B8 = _round_up(max(B, 1), 8)
    tb = min(_round_up(batch_tile, 8), B8)
    # Don't let the grid collapse to a single step when the batch can be split.
    if B8 >= 16 and B8 <= tb:
        tb = _round_up(pl.cdiv(B8, 2), 8)
    steps = pl.cdiv(B8, tb)
    # Prefer an even step count if it costs no additional padded rows.
    if steps > 1 and steps % 2 == 1:
        alt_tb = _round_up(pl.cdiv(B8, steps + 1), 8)
        alt_steps = pl.cdiv(B8, alt_tb)
        if alt_steps % 2 == 0 and alt_tb * alt_steps <= tb * steps:
            tb, steps = alt_tb, alt_steps
    return tb, tb * steps, steps


def actor_kernel(w1_ref, b1_ref, w2_ref, b2_ref, w3_ref, b3_ref,
                 x_ref, out_ref):
    # Matmul operand dtype follows the (pre-cast) weight refs: f32 exact path
    # or bf16 MXU fast path.  Accumulation is always f32.
    cd = w1_ref.dtype

    # fc1 + ReLU (BatchNorm already folded into w1/b1 by the wrapper).
    h1 = jnp.dot(x_ref[...], w1_ref[...],
                 preferred_element_type=jnp.float32) + b1_ref[...]
    h1 = jnp.maximum(h1, 0.0)

    # fc2 + ReLU
    h2 = jnp.dot(h1.astype(cd), w2_ref[...],
                 preferred_element_type=jnp.float32) + b2_ref[...]
    h2 = jnp.maximum(h2, 0.0)

    # fc3 + Tanh (padded action columns are exactly tanh(0)=0, sliced later).
    y = jnp.tanh(jnp.dot(h2.astype(cd), w3_ref[...],
                         preferred_element_type=jnp.float32) + b3_ref[...])

    out_ref[...] = y.astype(out_ref.dtype)


def actor_forward(states, params, *, use_bf16_matmul=False, batch_tile=512):
    """states: [B, S] float32.  params: dict of gamma, beta, w{1,2,3}, b{1,2,3}.

    Weights are stored [in, out] (transposed vs. nn.Linear) so the kernel does
    plain row-major x @ W + b on the MXU.
    """
    B, S = states.shape
    H1 = params["w1"].shape[1]
    H2 = params["w2"].shape[1]
    A = params["w3"].shape[1]

    # Lane-dense padded sizes (multiples of 128 on the lane axis).
    S_p = _round_up(S, 128)
    H1_p = _round_up(H1, 128)
    H2_p = _round_up(H2, 128)
    A_p = _round_up(A, 128)

    # --- BatchNorm1d training-mode statistics over the REAL batch rows
    #     (global stats regardless of batch tiling), folded into fc1:
    #     (x*scale + shift) @ w1 + b1  ==  x @ (scale.T*w1) + (shift@w1 + b1)
    x32 = states.astype(jnp.float32)
    mean = jnp.mean(x32, axis=0, keepdims=True)                     # [1, S]
    var = jnp.mean((x32 - mean) ** 2, axis=0, keepdims=True)        # biased
    inv_std = jax.lax.rsqrt(var + BN_EPS)
    scale = params["gamma"] * inv_std                               # [1, S]
    shift = params["beta"] - mean * scale                           # [1, S]
    w1_folded = params["w1"] * scale.reshape(-1, 1)                 # [S, H1]
    b1_folded = shift @ params["w1"] + params["b1"]                 # [1, H1]

    # Batch tiling (sublane multiple of 8; padded rows are garbage-but-sliced).
    TB, B_p, n_steps = _choose_batch_tiling(B, batch_tile)
    grid = (n_steps,)

    # Operand dtype: f32 exact path or bf16 MXU fast path (f32 accumulate).
    cd = jnp.bfloat16 if use_bf16_matmul else jnp.float32
    itm = jnp.dtype(cd).itemsize

    # Zero-padding keeps the math exact: padded input columns hit zero-padded
    # weight rows, padded hidden/action columns come from zero weight columns.
    # Cast streamed activations & resident weights ONCE here (not per step).
    x_p = _pad2d(x32, B_p, S_p).astype(cd)
    w1_p = _pad2d(w1_folded, S_p, H1_p).astype(cd)
    b1_p = _pad2d(b1_folded, 1, H1_p)
    w2_p = _pad2d(params["w2"], H1_p, H2_p).astype(cd)
    b2_p = _pad2d(params["b2"], 1, H2_p)
    w3_p = _pad2d(params["w3"], H2_p, A_p).astype(cd)
    b3_p = _pad2d(params["b3"], 1, A_p)

    flops = 2 * B_p * (S_p * H1_p + H1_p * H2_p + H2_p * A_p)
    bytes_accessed = (itm * (B_p * S_p            # streamed x
                             + S_p * H1_p + H1_p * H2_p + H2_p * A_p  # weights
                             + B_p * A_p)         # streamed out
                      + 4 * (H1_p + H2_p + A_p))  # f32 biases

    # Rough VMEM demand (resident weights/biases + double-buffered x/out tiles
    # + f32 intermediates), with headroom.  Only override the scoped limit when
    # it would exceed v5e's conservative 16 MiB default.
    vmem_est = int(1.5 * (itm * (S_p * H1_p + H1_p * H2_p + H2_p * A_p)
                          + 4 * (H1_p + H2_p + A_p)
                          + 2 * itm * TB * (S_p + A_p)
                          + 4 * TB * (H1_p + H2_p)))
    vmem_limit = min(max(vmem_est, 32 << 20), 64 << 20) \
        if vmem_est > (16 << 20) else None

    out_p = pl.pallas_call(
        actor_kernel,
        out_shape=jax.ShapeDtypeStruct((B_p, A_p), cd),
        grid=grid,
        in_specs=[
            # Weights / biases: same block every grid step -> VMEM-resident.
            pl.BlockSpec((S_p, H1_p), lambda i: (0, 0)),
            pl.BlockSpec((1, H1_p), lambda i: (0, 0)),
            pl.BlockSpec((H1_p, H2_p), lambda i: (0, 0)),
            pl.BlockSpec((1, H2_p), lambda i: (0, 0)),
            pl.BlockSpec((H2_p, A_p), lambda i: (0, 0)),
            pl.BlockSpec((1, A_p), lambda i: (0, 0)),
            # Activations: tiled & pipelined over the batch axis.
            pl.BlockSpec((TB, S_p), lambda i: (i, 0)),
        ],
        out_specs=pl.BlockSpec((TB, A_p), lambda i: (i, 0)),
        compiler_params=pltpu.CompilerParams(
            dimension_semantics=("parallel",),
            vmem_limit_bytes=vmem_limit),
        cost_estimate=pl.CostEstimate(
            flops=flops,
            transcendentals=B_p * A_p,
            bytes_accessed=bytes_accessed),
    )(w1_p, b1_p, w2_p, b2_p, w3_p, b3_p, x_p)

    return out_p[:B, :A].astype(jnp.float32)


def init_actor_params(key, state_size, action_size, fc1_units, fc2_units):
    """Deterministic init mirroring the PyTorch module's reset_parameters().

    Weights stored as [in, out].  fc1/fc2 weights & all biases: U(+-1/sqrt(fan_in))
    (biases keep nn.Linear's default init, reset_parameters only touches weights);
    fc3 weight: U(+-3e-3).
    """
    k = jax.random.split(key, 6)

    def uniform(k_, shape, lim):
        return jax.random.uniform(k_, shape, jnp.float32, -lim, lim)

    lim1 = 1.0 / np.sqrt(state_size)
    lim2 = 1.0 / np.sqrt(fc1_units)
    lim3 = 1.0 / np.sqrt(fc2_units)
    return {
        "gamma": jnp.ones((1, state_size), jnp.float32),
        "beta": jnp.zeros((1, state_size), jnp.float32),
        "w1": uniform(k[0], (state_size, fc1_units), lim1),
        "b1": uniform(k[1], (1, fc1_units), lim1),
        "w2": uniform(k[2], (fc1_units, fc2_units), lim2),
        "b2": uniform(k[3], (1, fc2_units), lim2),
        "w3": uniform(k[4], (fc2_units, action_size), 3e-3),
        "b3": uniform(k[5], (1, action_size), lim3),
    }


def actor_reference(states, p):
    """Pure-JAX reference for correctness checking."""
    x = states.astype(jnp.float32)
    mean = jnp.mean(x, axis=0, keepdims=True)
    var = jnp.mean((x - mean) ** 2, axis=0, keepdims=True)
    xn = (x - mean) / jnp.sqrt(var + BN_EPS) * p["gamma"] + p["beta"]
    h1 = jnp.maximum(xn @ p["w1"] + p["b1"], 0.0)
    h2 = jnp.maximum(h1 @ p["w2"] + p["b2"], 0.0)
    return jnp.tanh(h2 @ p["w3"] + p["b3"])


if __name__ == "__main__":
    # Shapes consistent with the module (fc defaults = 256); state_size
    # deliberately not a multiple of 128 to exercise the padding path, and a
    # batch large enough that the tiling chooser produces an even >=2 grid.
    batch = 512
    state_size = 33
    action_size = 4
    fc1_units = 256
    fc2_units = 256

    key = jax.random.PRNGKey(0)
    k_params, k_states = jax.random.split(key)

    params = init_actor_params(k_params, state_size, action_size,
                               fc1_units, fc2_units)
    states = jax.random.normal(k_states, (batch, state_size), jnp.float32)

    ref = actor_reference(states, params)

    # f32-operand path (BN folded into fc1; same math, reordered rounding).
    out = actor_forward(states, params)          # TB=256 -> grid=(2,)
    out = jax.block_until_ready(out)
    np.testing.assert_allclose(np.asarray(out), np.asarray(ref),
                               rtol=1e-4, atol=1e-4)

    # bf16-operand MXU fast path (pre-cast weights + bf16 activation stream);
    # f32 accumulate, looser tolerance.
    out_bf16 = actor_forward(states, params, use_bf16_matmul=True)
    out_bf16 = jax.block_until_ready(out_bf16)
    np.testing.assert_allclose(np.asarray(out_bf16), np.asarray(ref),
                               rtol=2e-2, atol=2e-2)

    # Small / ragged batch: exercises the tile chooser & row padding path.
    states_small = jax.random.normal(jax.random.PRNGKey(1),
                                     (24, state_size), jnp.float32)
    ref_small = actor_reference(states_small, params)
    out_small = jax.block_until_ready(actor_forward(states_small, params))
    np.testing.assert_allclose(np.asarray(out_small), np.asarray(ref_small),
                               rtol=1e-4, atol=1e-4)

    # TODO(synk): BatchNorm1d running_mean/running_var tracking (training-time
    # buffer side effect) is not materialized; only the forward output is produced.

    print("KERNEL_OK")
</pallas_src>

<mosaic_0001>
module attributes {stable_mosaic.version = 11 : i64} {
  func.func @actor_kernel(%arg0: i32, %arg1: memref<128x256xf32, #tpu.memory_space<vmem>>, %arg2: memref<1x256xf32, #tpu.memory_space<vmem>>, %arg3: memref<256x256xf32, #tpu.memory_space<vmem>>, %arg4: memref<1x256xf32, #tpu.memory_space<vmem>>, %arg5: memref<256x128xf32, #tpu.memory_space<vmem>>, %arg6: memref<1x128xf32, #tpu.memory_space<vmem>>, %arg7: memref<256x128xf32, #tpu.memory_space<vmem>>, %arg8: memref<256x128xf32, #tpu.memory_space<vmem>>) attributes {dimension_semantics = [#tpu.dimension_semantics<parallel>], iteration_bounds = array<i64: 2>, scalar_prefetch = 0 : i64, scratch_operands = 0 : i64, tpu.core_type = #tpu.core_type<tc>, window_params = [{pipeline_mode = #tpu.pipeline_mode<synchronous>, transform_indices = @transform_0, window_bounds = array<i64: 128, 256>}, {pipeline_mode = #tpu.pipeline_mode<synchronous>, transform_indices = @transform_1, window_bounds = array<i64: 1, 256>}, {pipeline_mode = #tpu.pipeline_mode<synchronous>, transform_indices = @transform_2, window_bounds = array<i64: 256, 256>}, {pipeline_mode = #tpu.pipeline_mode<synchronous>, transform_indices = @transform_3, window_bounds = array<i64: 1, 256>}, {pipeline_mode = #tpu.pipeline_mode<synchronous>, transform_indices = @transform_4, window_bounds = array<i64: 256, 128>}, {pipeline_mode = #tpu.pipeline_mode<synchronous>, transform_indices = @transform_5, window_bounds = array<i64: 1, 128>}, {transform_indices = @transform_6, window_bounds = array<i64: 256, 128>}, {transform_indices = @transform_7, window_bounds = array<i64: 256, 128>}]} {
    %c0 = arith.constant 0 : index
    %c0_0 = arith.constant 0 : index
    %0 = vector.load %arg7[%c0, %c0_0] : memref<256x128xf32, #tpu.memory_space<vmem>>, vector<256x128xf32>
    %c0_1 = arith.constant 0 : index
    %c0_2 = arith.constant 0 : index
    %1 = vector.load %arg1[%c0_1, %c0_2] : memref<128x256xf32, #tpu.memory_space<vmem>>, vector<128x256xf32>
    %cst = arith.constant dense<0.000000e+00> : vector<256x256xf32>
    %2 = tpu.matmul %0, %1, %cst {dimension_numbers = #tpu.dot_dimension_numbers<[1], [0], [0], [1], [0, 0, 1, 1], [], []>} : vector<256x128xf32>, vector<128x256xf32>, vector<256x256xf32> -> vector<256x256xf32>
    %c0_3 = arith.constant 0 : index
    %c0_4 = arith.constant 0 : index
    %3 = vector.load %arg2[%c0_3, %c0_4] : memref<1x256xf32, #tpu.memory_space<vmem>>, vector<1x256xf32>
    %4 = vector.broadcast %3 : vector<1x256xf32> to vector<256x256xf32>
    %5 = arith.addf %2, %4 : vector<256x256xf32>
    %cst_5 = arith.constant 0.000000e+00 : f32
    %6 = vector.broadcast %cst_5 : f32 to vector<256x256xf32>
    %7 = arith.maximumf %5, %6 : vector<256x256xf32>
    %c0_6 = arith.constant 0 : index
    %c0_7 = arith.constant 0 : index
    %8 = vector.load %arg3[%c0_6, %c0_7] : memref<256x256xf32, #tpu.memory_space<vmem>>, vector<256x256xf32>
    %cst_8 = arith.constant dense<0.000000e+00> : vector<256x256xf32>
    %9 = tpu.matmul %7, %8, %cst_8 {dimension_numbers = #tpu.dot_dimension_numbers<[1], [0], [0], [1], [0, 0, 1, 1], [], []>} : vector<256x256xf32>, vector<256x256xf32>, vector<256x256xf32> -> vector<256x256xf32>
    %c0_9 = arith.constant 0 : index
    %c0_10 = arith.constant 0 : index
    %10 = vector.load %arg4[%c0_9, %c0_10] : memref<1x256xf32, #tpu.memory_space<vmem>>, vector<1x256xf32>
    %11 = vector.broadcast %10 : vector<1x256xf32> to vector<256x256xf32>
    %12 = arith.addf %9, %11 : vector<256x256xf32>
    %cst_11 = arith.constant 0.000000e+00 : f32
    %13 = vector.broadcast %cst_11 : f32 to vector<256x256xf32>
    %14 = arith.maximumf %12, %13 : vector<256x256xf32>
    %c0_12 = arith.constant 0 : index
    %c0_13 = arith.constant 0 : index
    %15 = vector.load %arg5[%c0_12, %c0_13] : memref<256x128xf32, #tpu.memory_space<vmem>>, vector<256x128xf32>
    %cst_14 = arith.constant dense<0.000000e+00> : vector<256x128xf32>
    %16 = tpu.matmul %14, %15, %cst_14 {dimension_numbers = #tpu.dot_dimension_numbers<[1], [0], [0], [1], [0, 0, 1, 1], [], []>} : vector<256x256xf32>, vector<256x128xf32>, vector<256x128xf32> -> vector<256x128xf32>
    %c0_15 = arith.constant 0 : index
    %c0_16 = arith.constant 0 : index
    %17 = vector.load %arg6[%c0_15, %c0_16] : memref<1x128xf32, #tpu.memory_space<vmem>>, vector<1x128xf32>
    %18 = vector.broadcast %17 : vector<1x128xf32> to vector<256x128xf32>
    %19 = arith.addf %16, %18 : vector<256x128xf32>
    %20 = math.tanh %19 : vector<256x128xf32>
    %c0_17 = arith.constant 0 : index
    %c0_18 = arith.constant 0 : index
    %21 = vector.load %arg8[%c0_17, %c0_18] : memref<256x128xf32, #tpu.memory_space<vmem>>, vector<256x128xf32>
    tpu.vector_store %arg8[%c0_17, %c0_18], %20 {strides = array<i32>} : memref<256x128xf32, #tpu.memory_space<vmem>>, vector<256x128xf32>,
    return
  }
  func.func @transform_0(%arg0: i32) -> (i32, i32) {
    %c0_i32 = arith.constant 0 : i32
    %c0_i32_0 = arith.constant 0 : i32
    %c0_i32_1 = arith.constant 0 : i32
    return %c0_i32, %c0_i32_0 : i32, i32
  }
  func.func @transform_1(%arg0: i32) -> (i32, i32) {
    %c0_i32 = arith.constant 0 : i32
    %c0_i32_0 = arith.constant 0 : i32
    %c0_i32_1 = arith.constant 0 : i32
    return %c0_i32, %c0_i32_0 : i32, i32
  }
  func.func @transform_2(%arg0: i32) -> (i32, i32) {
    %c0_i32 = arith.constant 0 : i32
    %c0_i32_0 = arith.constant 0 : i32
    %c0_i32_1 = arith.constant 0 : i32
    return %c0_i32, %c0_i32_0 : i32, i32
  }
  func.func @transform_3(%arg0: i32) -> (i32, i32) {
    %c0_i32 = arith.constant 0 : i32
    %c0_i32_0 = arith.constant 0 : i32
    %c0_i32_1 = arith.constant 0 : i32
    return %c0_i32, %c0_i32_0 : i32, i32
  }
  func.func @transform_4(%arg0: i32) -> (i32, i32) {
    %c0_i32 = arith.constant 0 : i32
    %c0_i32_0 = arith.constant 0 : i32
    %c0_i32_1 = arith.constant 0 : i32
    return %c0_i32, %c0_i32_0 : i32, i32
  }
  func.func @transform_5(%arg0: i32) -> (i32, i32) {
    %c0_i32 = arith.constant 0 : i32
    %c0_i32_0 = arith.constant 0 : i32
    %c0_i32_1 = arith.constant 0 : i32
    return %c0_i32, %c0_i32_0 : i32, i32
  }
  func.func @transform_6(%arg0: i32) -> (i32, i32) {
    %c0_i32 = arith.constant 0 : i32
    %c0_i32_0 = arith.constant 0 : i32
    return %arg0, %c0_i32 : i32, i32
  }
  func.func @transform_7(%arg0: i32) -> (i32, i32) {
    %c0_i32 = arith.constant 0 : i32
    %c0_i32_0 = arith.constant 0 : i32
    return %arg0, %c0_i32 : i32, i32
  }
}

</mosaic_0001>

<llo_original>
// kernel: tpu_custom_call.1
$region0: #{tpu_custom_call.1}
  #allocation0 [shape = 'u32[]', space=smem, size = 0x4, offset = 0x4, fixed_abs, tag = 'smem constant byte address 0x4 - core index']
  #allocation1 [shape = 'u32[72,128]{1,0:T(1,128)}', space=vmem, size = 0x9000, scoped, tag = 'internal scratch']
  %s0 = inlined_call_operand.hbm [shape: f32[128,256], index: 0, kind: input, shape index: {}]
  %s1 = inlined_call_operand.hbm [shape: f32[1,256], index: 1, kind: input, shape index: {}]
  %s2 = inlined_call_operand.hbm [shape: f32[256,256], index: 2, kind: input, shape index: {}]
  %s3 = inlined_call_operand.vmem [shape: f32[1,256], index: 3, kind: input, shape index: {}]
  %s4 = inlined_call_operand.hbm [shape: f32[256,128], index: 4, kind: input, shape index: {}]
  %s5 = inlined_call_operand.vmem [shape: f32[1,128], index: 5, kind: input, shape index: {}]
  %s6 = inlined_call_operand.hbm [shape: f32[512,128], index: 6, kind: input, shape index: {}]
  %s7 = inlined_call_operand.hbm [shape: f32[512,128], index: 7, kind: output, shape index: {}]
  %s8 = sld [smem:[#allocation0]]
  $region81: #{tpu_custom_call.1} parent=0
    _
  %s10 = ssub.s32 1, %s8
  %s11 = scalar_select 0, %s10, %s8
  $region1: #{tpu_custom_call.1} parent=0
    #allocation2 [shape = 'u8[131072]{0}', space=vmem, size = 0x20000, scoped, tag = 'input window, operand 0, single buffered']
    #allocation3 [shape = 's32[2]{0}', space=sflag, size = 0x8, scoped, tag = 'scoped memory for tpu_custom_call.1']
    #allocation4 [shape = 's32[2]{0}', space=sflag, size = 0x8, scoped, tag = 'scoped memory for tpu_custom_call.1']
    #allocation5 [shape = 'u8[1024]{0}', space=vmem, size = 0x400, scoped, tag = 'input window, operand 1, single buffered']
    #allocation6 [shape = 's32[1]{0}', space=sflag, size = 0x4, scoped, tag = 'scoped memory for tpu_custom_call.1']
    #allocation7 [shape = 'u8[262144]{0}', space=vmem, size = 0x40000, scoped, tag = 'input window, operand 2, single buffered']
    #allocation8 [shape = 'u8[131072]{0}', space=vmem, size = 0x20000, scoped, tag = 'input window, operand 4, single buffered']
    #allocation9 [shape = 's32[1]{0}', space=sflag, size = 0x4, scoped, tag = 'scoped memory for tpu_custom_call.1']
    #allocation10 [shape = 'u8[262144]{0}', space=vmem, size = 0x40000, scoped, tag = 'input window, operand 6']
    #allocation11 [shape = 'u8[262144]{0}', space=vmem, size = 0x40000, scoped, tag = 'output window, operand 0']
    %12 = vsyncpa [#allocation3], 0
    %13 = vsyncpa [#allocation6], 0
    %14 = vsyncpa [#allocation9], 0
    %15 = vsyncpa [#allocation4], 0
    %s16 = scalar_lea.sflag [#allocation4], 1
    %17 = vsyncpa %s16, 0
    loop: start=0, step=1, limit=4
    $region2: #{tpu_custom_call.1} parent=1 // loop_pre_header
      _
    $region3: #{tpu_custom_call.1} parent=1 // loop_header
      %s19 = sphi 0, %s23
      %p20 = scmp.ge.s32.totalorder %s19, 4
      %s27 = sphi 0, %s27
      %s29 = sphi 0, %s27
      %s30 = sphi 0, %s29
      %s44 = sphi 0, %s30
      %s48 = sphi 0, %s48
      %s50 = sphi 0, %s48
      %s51 = sphi 0, %s50
      %s65 = sphi 0, %s51
      %s69 = sphi 0, %s69
      %s71 = sphi 0, %s69
      %s72 = sphi 0, %s71
      %s86 = sphi 0, %s72
      %s90 = sphi 0, %s90
      %s92 = sphi 0, %s90
      %s93 = sphi 0, %s92
      %s107 = sphi 0, %s93
      %s111 = sphi 0, %s111
      %s113 = sphi 0, %s111
      %s114 = sphi 0, %s113
      %s128 = sphi 0, %s114
      %s132 = sphi 0, %s132
      %s134 = sphi 0, %s132
      %s135 = sphi 0, %s134
      %s149 = sphi 0, %s135
      %s155 = sphi 0, %s157
      %s158 = sphi 0, %s155
      %s159 = sphi 0, %s158
      %s175 = sphi 0, %s159
      %s181 = sphi 0, %s183
      %s184 = sphi 0, %s181
      %s185 = sphi 0, %s184
      %s201 = sphi 0, %s185
    $region4: #{tpu_custom_call.1} parent=1 // loop_header_branch
      %22 = sbr.rel (%p20) target = $region8
    $region5: #{tpu_custom_call.1} parent=1 // loop_body
      %s24 = ssub.s32 %s19, 1
      %s25 = ssub.s32 %s19, 2
      %s26 = sadd.s32 %s19, 1
      %s28 = sadd.s32 %s27, 1
      %p31 = scmp.eq.s32.totalorder %s19, 1
      %p32 = scmp.ne.s32.totalorder %s27, %s29
      %p33 = scmp.eq.s32.totalorder %s19, 0
      %p34 = por %p32, %p33
      %p35 = scmp.ne.s32.totalorder %s27, %s29
      %p36 = scmp.eq.s32.totalorder %s24, 1
      %p37 = por %p35, %p36
      %p38 = scmp.ne.s32.totalorder %s29, %s30
      %p39 = scmp.eq.s32.totalorder %s24, 0
      %p40 = por %p38, %p39
      %p41 = scmp.ne.s32.totalorder %s29, %s30
      %p42 = scmp.eq.s32.totalorder %s25, 1
      %p43 = por %p41, %p42
      %p45 = scmp.ne.s32.totalorder %s30, %s44
      %p46 = scmp.eq.s32.totalorder %s25, 0
      %p47 = por %p45, %p46
      %s49 = sadd.s32 %s48, 1
      %p52 = scmp.eq.s32.totalorder %s19, 1
      %p53 = scmp.ne.s32.totalorder %s48, %s50
      %p54 = scmp.eq.s32.totalorder %s19, 0
      %p55 = por %p53, %p54
      %p56 = scmp.ne.s32.totalorder %s48, %s50
      %p57 = scmp.eq.s32.totalorder %s24, 1
      %p58 = por %p56, %p57
      %p59 = scmp.ne.s32.totalorder %s50, %s51
      %p60 = scmp.eq.s32.totalorder %s24, 0
      %p61 = por %p59, %p60
      %p62 = scmp.ne.s32.totalorder %s50, %s51
      %p63 = scmp.eq.s32.totalorder %s25, 1
      %p64 = por %p62, %p63
      %p66 = scmp.ne.s32.totalorder %s51, %s65
      %p67 = scmp.eq.s32.totalorder %s25, 0
      %p68 = por %p66, %p67
      %s70 = sadd.s32 %s69, 1
      %p73 = scmp.eq.s32.totalorder %s19, 1
      %p74 = scmp.ne.s32.totalorder %s69, %s71
      %p75 = scmp.eq.s32.totalorder %s19, 0
      %p76 = por %p74, %p75
      %p77 = scmp.ne.s32.totalorder %s69, %s71
      %p78 = scmp.eq.s32.totalorder %s24, 1
      %p79 = por %p77, %p78
      %p80 = scmp.ne.s32.totalorder %s71, %s72
      %p81 = scmp.eq.s32.totalorder %s24, 0
      %p82 = por %p80, %p81
      %p83 = scmp.ne.s32.totalorder %s71, %s72
      %p84 = scmp.eq.s32.totalorder %s25, 1
      %p85 = por %p83, %p84
      %p87 = scmp.ne.s32.totalorder %s72, %s86
      %p88 = scmp.eq.s32.totalorder %s25, 0
      %p89 = por %p87, %p88
      %s91 = sadd.s32 %s90, 1
      %p94 = scmp.eq.s32.totalorder %s19, 1
      %p95 = scmp.ne.s32.totalorder %s90, %s92
      %p96 = scmp.eq.s32.totalorder %s19, 0
      %p97 = por %p95, %p96
      %p98 = scmp.ne.s32.totalorder %s90, %s92
      %p99 = scmp.eq.s32.totalorder %s24, 1
      %p100 = por %p98, %p99
      %p101 = scmp.ne.s32.totalorder %s92, %s93
      %p102 = scmp.eq.s32.totalorder %s24, 0
      %p103 = por %p101, %p102
      %p104 = scmp.ne.s32.totalorder %s92, %s93
      %p105 = scmp.eq.s32.totalorder %s25, 1
      %p106 = por %p104, %p105
      %p108 = scmp.ne.s32.totalorder %s93, %s107
      %p109 = scmp.eq.s32.totalorder %s25, 0
      %p110 = por %p108, %p109
      %s112 = sadd.s32 %s111, 1
      %p115 = scmp.eq.s32.totalorder %s19, 1
      %p116 = scmp.ne.s32.totalorder %s111, %s113
      %p117 = scmp.eq.s32.totalorder %s19, 0
      %p118 = por %p116, %p117
      %p119 = scmp.ne.s32.totalorder %s111, %s113
      %p120 = scmp.eq.s32.totalorder %s24, 1
      %p121 = por %p119, %p120
      %p122 = scmp.ne.s32.totalorder %s113, %s114
      %p123 = scmp.eq.s32.totalorder %s24, 0
      %p124 = por %p122, %p123
      %p125 = scmp.ne.s32.totalorder %s113, %s114
      %p126 = scmp.eq.s32.totalorder %s25, 1
      %p127 = por %p125, %p126
      %p129 = scmp.ne.s32.totalorder %s114, %s128
      %p130 = scmp.eq.s32.totalorder %s25, 0
      %p131 = por %p129, %p130
      %s133 = sadd.s32 %s132, 1
      %p136 = scmp.eq.s32.totalorder %s19, 1
      %p137 = scmp.ne.s32.totalorder %s132, %s134
      %p138 = scmp.eq.s32.totalorder %s19, 0
      %p139 = por %p137, %p138
      %p140 = scmp.ne.s32.totalorder %s132, %s134
      %p141 = scmp.eq.s32.totalorder %s24, 1
      %p142 = por %p140, %p141
      %p143 = scmp.ne.s32.totalorder %s134, %s135
      %p144 = scmp.eq.s32.totalorder %s24, 0
      %p145 = por %p143, %p144
      %p146 = scmp.ne.s32.totalorder %s134, %s135
      %p147 = scmp.eq.s32.totalorder %s25, 1
      %p148 = por %p146, %p147
      %p150 = scmp.ne.s32.totalorder %s135, %s149
      %p151 = scmp.eq.s32.totalorder %s25, 0
      %p152 = por %p150, %p151
      %s153 = ssub.s32 %s19, %s26
      %p154 = scmp.eq.s32.totalorder %s153, 0
      %s156 = sadd.s32 %s155, 1
      %s157 = scalar_select %p154, %s155, %s156
      %p160 = pneg %p154
      %p161 = scmp.eq.s32.totalorder %s19, 1
      %p162 = por %p160, %p161
      %p163 = scmp.ne.s32.totalorder %s155, %s158
      %p164 = scmp.eq.s32.totalorder %s19, 0
      %p165 = por %p163, %p164
      %p166 = scmp.ne.s32.totalorder %s155, %s158
      %p167 = scmp.eq.s32.totalorder %s24, 1
      %p168 = por %p166, %p167
      %p169 = scmp.ne.s32.totalorder %s158, %s159
      %p170 = scmp.eq.s32.totalorder %s24, 0
      %p171 = por %p169, %p170
      %p172 = scmp.ne.s32.totalorder %s158, %s159
      %p173 = scmp.eq.s32.totalorder %s25, 1
      %p174 = por %p172, %p173
      %p176 = scmp.ne.s32.totalorder %s159, %s175
      %p177 = scmp.eq.s32.totalorder %s25, 0
      %p178 = por %p176, %p177
      %s179 = ssub.s32 %s19, %s26
      %p180 = scmp.eq.s32.totalorder %s179, 0
      %s182 = sadd.s32 %s181, 1
      %s183 = scalar_select %p180, %s181, %s182
      %p186 = pneg %p180
      %p187 = scmp.eq.s32.totalorder %s19, 1
      %p188 = por %p186, %p187
      %p189 = scmp.ne.s32.totalorder %s181, %s184
      %p190 = scmp.eq.s32.totalorder %s19, 0
      %p191 = por %p189, %p190
      %p192 = scmp.ne.s32.totalorder %s181, %s184
      %p193 = scmp.eq.s32.totalorder %s24, 1
      %p194 = por %p192, %p193
      %p195 = scmp.ne.s32.totalorder %s184, %s185
      %p196 = scmp.eq.s32.totalorder %s24, 0
      %p197 = por %p195, %p196
      %p198 = scmp.ne.s32.totalorder %s184, %s185
      %p199 = scmp.eq.s32.totalorder %s25, 1
      %p200 = por %p198, %p199
      %p202 = scmp.ne.s32.totalorder %s185, %s201
      %p203 = scmp.eq.s32.totalorder %s25, 0
      %p204 = por %p202, %p203
      %p205 = scmp.le.s32.totalorder 1, %s19
      %p206 = scmp.lt.s32.totalorder %s19, 3
      %p207 = pnand %p205, %p206
      %p208 = pneg %p207
      // Predicated region
      $region9: #{tpu_custom_call.1} parent=5 // pred_check
        _
      $region10: #{tpu_custom_call.1} parent=5 // pred_check_branch
        %210 = sbr.rel (%p207) target = $region12
      $region11: #{tpu_custom_call.1} parent=5 // pred_region
        %s211 = ssub.s32 %s19, 1
        // Predicated region
        $region13: #{tpu_custom_call.1} parent=11 // pred_check
          %p212 = pneg %p40
        $region14: #{tpu_custom_call.1} parent=11 // pred_check_branch
          %214 = sbr.rel (%p212) target = $region16
        $region15: #{tpu_custom_call.1} parent=11 // pred_region
          %216 = vsyncadd [#allocation3], 0
          %s217 = sshll.u32 %s0, 4
          %s218 = int_to_ptr.hbm [resolvable:$true] %s217
          %s219 = sshll.u32 [#allocation2], 4
          %s220 = int_to_ptr.vmem [resolvable:$true] %s219
          %225 = dma.hbm_to_vmem [thread:$0]  %s218, 4096, %s220, [#allocation3], 256, 256, 16
        $region16: #{tpu_custom_call.1} parent=11 // pred_fallthru
          _
        // Predicated region
        $region17: #{tpu_custom_call.1} parent=11 // pred_check
          %p226 = pneg %p61
        $region18: #{tpu_custom_call.1} parent=11 // pred_check_branch
          %228 = sbr.rel (%p226) target = $region20
        $region19: #{tpu_custom_call.1} parent=11 // pred_region
          %230 = vsyncadd [#allocation6], 0
          %s232 = sshll.u32 %s1, 4
          %s233 = int_to_ptr.hbm [resolvable:$true] %s232
          %s234 = sshll.u32 [#allocation5], 4
          %s235 = int_to_ptr.vmem [resolvable:$true] %s234
          %237 = dma.hbm_to_vmem [thread:$0]  %s233, 32, %s235, [#allocation6]
        $region20: #{tpu_custom_call.1} parent=11 // pred_fallthru
          _
        // Predicated region
        $region21: #{tpu_custom_call.1} parent=11 // pred_check
          %p238 = pneg %p82
        $region22: #{tpu_custom_call.1} parent=11 // pred_check_branch
          %240 = sbr.rel (%p238) target = $region24
        $region23: #{tpu_custom_call.1} parent=11 // pred_region
          %242 = vsyncadd [#allocation6], 0
          %s243 = sshll.u32 %s2, 4
          %s244 = int_to_ptr.hbm [resolvable:$true] %s243
          %s245 = sshll.u32 [#allocation7], 4
          %s246 = int_to_ptr.vmem [resolvable:$true] %s245
          %251 = dma.hbm_to_vmem [thread:$0]  %s244, 8192, %s246, [#allocation6], 256, 256, 16
        $region24: #{tpu_custom_call.1} parent=11 // pred_fallthru
          _
        // Predicated region
        $region25: #{tpu_custom_call.1} parent=11 // pred_check
          %p252 = pneg %p103
        $region26: #{tpu_custom_call.1} parent=11 // pred_check_branch
          %254 = sbr.rel (%p252) target = $region28
        $region27: #{tpu_custom_call.1} parent=11 // pred_region
          _
        $region28: #{tpu_custom_call.1} parent=11 // pred_fallthru
          _
        // Predicated region
        $region29: #{tpu_custom_call.1} parent=11 // pred_check
          %p255 = pneg %p124
        $region30: #{tpu_custom_call.1} parent=11 // pred_check_branch
          %257 = sbr.rel (%p255) target = $region32
        $region31: #{tpu_custom_call.1} parent=11 // pred_region
          %259 = vsyncadd [#allocation9], 0
          %s260 = sshll.u32 %s4, 4
          %s261 = int_to_ptr.hbm [resolvable:$true] %s260
          %s262 = sshll.u32 [#allocation8], 4
          %s263 = int_to_ptr.vmem [resolvable:$true] %s262
          %268 = dma.hbm_to_vmem [thread:$0]  %s261, 4096, %s263, [#allocation9], 128, 128, 8
        $region32: #{tpu_custom_call.1} parent=11 // pred_fallthru
          _
        // Predicated region
        $region33: #{tpu_custom_call.1} parent=11 // pred_check
          %p269 = pneg %p145
        $region34: #{tpu_custom_call.1} parent=11 // pred_check_branch
          %271 = sbr.rel (%p269) target = $region36
        $region35: #{tpu_custom_call.1} parent=11 // pred_region
          _
        $region36: #{tpu_custom_call.1} parent=11 // pred_fallthru
          _
      $region12: #{tpu_custom_call.1} parent=5 // pred_fallthru
        _
      %p272 = scmp.lt.s32.totalorder %s19, 2
      // Predicated region
      $region37: #{tpu_custom_call.1} parent=5 // pred_check
        %p273 = pneg %p272
      $region38: #{tpu_custom_call.1} parent=5 // pred_check_branch
        %275 = sbr.rel (%p273) target = $region40
      $region39: #{tpu_custom_call.1} parent=5 // pred_region
        // Predicated region
        $region41: #{tpu_custom_call.1} parent=39 // pred_check
          %p276 = pneg %p165
        $region42: #{tpu_custom_call.1} parent=39 // pred_check_branch
          %278 = sbr.rel (%p276) target = $region44
        $region43: #{tpu_custom_call.1} parent=39 // pred_region
          %s279 = sand.u32 %s19, 1
          %s280 = scalar_lea.sflag [#allocation3], %s279
          %s281 = sand.u32 %s155, 1
          %s282 = smul.addr %s281, 256
          %s283 = scalar_lea.vmem [#allocation10], %s282
          %s284 = smul.u32 32, %s19
          %286 = vsyncadd %s280, 0
          %s287 = smul.addr %s284, 8
          %s288 = scalar_lea.hbm %s6, %s287
          %s289 = sshll.u32 %s288, 4
          %s290 = int_to_ptr.hbm [resolvable:$true] %s289
          %s291 = sshll.u32 %s283, 4
          %s292 = int_to_ptr.vmem [resolvable:$true] %s291
          %297 = dma.hbm_to_vmem [thread:$0]  %s290, 4096, %s292, %s280, 128, 128, 8
        $region44: #{tpu_custom_call.1} parent=39 // pred_fallthru
          _
      $region40: #{tpu_custom_call.1} parent=5 // pred_fallthru
        _
      %p298 = scmp.le.s32.totalorder 1, %s19
      %p299 = scmp.lt.s32.totalorder %s19, 3
      %p300 = pnand %p298, %p299
      %p301 = pneg %p300
      // Predicated region
      $region45: #{tpu_custom_call.1} parent=5 // pred_check
        _
      $region46: #{tpu_custom_call.1} parent=5 // pred_check_branch
        %303 = sbr.rel (%p300) target = $region48
      $region47: #{tpu_custom_call.1} parent=5 // pred_region
        %s304 = ssub.s32 %s19, 1
        // Predicated region
        $region49: #{tpu_custom_call.1} parent=47 // pred_check
          %p305 = pneg %p40
        $region50: #{tpu_custom_call.1} parent=47 // pred_check_branch
          %307 = sbr.rel (%p305) target = $region52
        $region51: #{tpu_custom_call.1} parent=47 // pred_region
          %309 = dma.done [#allocation3], 4096
        $region52: #{tpu_custom_call.1} parent=47 // pred_fallthru
          _
        // Predicated region
        $region53: #{tpu_custom_call.1} parent=47 // pred_check
          %p310 = pneg %p61
        $region54: #{tpu_custom_call.1} parent=47 // pred_check_branch
          %312 = sbr.rel (%p310) target = $region56
        $region55: #{tpu_custom_call.1} parent=47 // pred_region
          %314 = dma.done [#allocation6], 32
        $region56: #{tpu_custom_call.1} parent=47 // pred_fallthru
          _
        // Predicated region
        $region57: #{tpu_custom_call.1} parent=47 // pred_check
          %p315 = pneg %p82
        $region58: #{tpu_custom_call.1} parent=47 // pred_check_branch
          %317 = sbr.rel (%p315) target = $region60
        $region59: #{tpu_custom_call.1} parent=47 // pred_region
          %319 = dma.done [#allocation6], 8192
        $region60: #{tpu_custom_call.1} parent=47 // pred_fallthru
          _
        // Predicated region
        $region61: #{tpu_custom_call.1} parent=47 // pred_check
          %p320 = pneg %p124
        $region62: #{tpu_custom_call.1} parent=47 // pred_check_branch
          %322 = sbr.rel (%p320) target = $region64
        $region63: #{tpu_custom_call.1} parent=47 // pred_region
          %324 = dma.done [#allocation9], 4096
        $region64: #{tpu_custom_call.1} parent=47 // pred_fallthru
          _
        %s325 = sand.u32 %s24, 1
        %s326 = scalar_lea.sflag [#allocation3], %s325
        %s327 = sand.u32 %s158, 1
        %s328 = smul.addr %s327, 256
        %s329 = scalar_lea.vmem [#allocation10], %s328
        // Predicated region
        $region65: #{tpu_custom_call.1} parent=47 // pred_check
          %p330 = pneg %p171
        $region66: #{tpu_custom_call.1} parent=47 // pred_check_branch
          %332 = sbr.rel (%p330) target = $region68
        $region67: #{tpu_custom_call.1} parent=47 // pred_region
          %334 = dma.done %s326, 4096
        $region68: #{tpu_custom_call.1} parent=47 // pred_fallthru
          _
        %p335 = pneg %p40
        %p336 = pneg %p37
        %p337 = pneg %p61
        %p338 = pneg %p58
        %p339 = pneg %p82
        %p340 = pneg %p79
        %p341 = pneg %p103
        %p342 = pneg %p100
        %p343 = pneg %p124
        %p344 = pneg %p121
        %p345 = pneg %p145
        %p346 = pneg %p142
        %s347 = sand.u32 %s24, 1
        %s348 = scalar_lea.sflag [#allocation3], %s347
        %s349 = sand.u32 %s158, 1
        %s350 = smul.addr %s349, 256
        %s351 = scalar_lea.vmem [#allocation10], %s350
        %p352 = pneg %p171
        %p353 = pneg %p168
        %p354 = pneg %p197
        %p355 = pneg %p194
        %s356 = sand.u32 %s184, 1
        %s357 = scalar_lea.sflag [#allocation4], %s356
        %s358 = sand.u32 %s184, 1
        %s359 = smul.addr %s358, 256
        %s360 = scalar_lea.vmem [#allocation11], %s359
        %s361 = smul.u32 32, %s24
        %s362 = smul.u32 32, %s24
        %v363 = vld [vmem:[%s329] sm:$0xff]
        %v364 = vld [vmem:[%s329 + $0x8] sm:$0xff]
        %v365 = vld [vmem:[%s329 + $0x10] sm:$0xff]
        %v366 = vld [vmem:[%s329 + $0x18] sm:$0xff]
        %v367 = vld [vmem:[%s329 + $0x20] sm:$0xff]
        %v368 = vld [vmem:[%s329 + $0x28] sm:$0xff]
        %v369 = vld [vmem:[%s329 + $0x30] sm:$0xff]
        %v370 = vld [vmem:[%s329 + $0x38] sm:$0xff]
        %v371 = vld [vmem:[%s329 + $0x40] sm:$0xff]
        %v372 = vld [vmem:[%s329 + $0x48] sm:$0xff]
        %v373 = vld [vmem:[%s329 + $0x50] sm:$0xff]
        %v374 = vld [vmem:[%s329 + $0x58] sm:$0xff]
        %v375 = vld [vmem:[%s329 + $0x60] sm:$0xff]
        %v376 = vld [vmem:[%s329 + $0x68] sm:$0xff]
        %v377 = vld [vmem:[%s329 + $0x70] sm:$0xff]
        %v378 = vld [vmem:[%s329 + $0x78] sm:$0xff]
        %v379 = vld [vmem:[%s329 + $0x80] sm:$0xff]
        %v380 = vld [vmem:[%s329 + $0x88] sm:$0xff]
        %v381 = vld [vmem:[%s329 + $0x90] sm:$0xff]
        %v382 = vld [vmem:[%s329 + $0x98] sm:$0xff]
        %v383 = vld [vmem:[%s329 + $0xa0] sm:$0xff]
        %v384 = vld [vmem:[%s329 + $0xa8] sm:$0xff]
        %v385 = vld [vmem:[%s329 + $0xb0] sm:$0xff]
        %v386 = vld [vmem:[%s329 + $0xb8] sm:$0xff]
        %v387 = vld [vmem:[%s329 + $0xc0] sm:$0xff]
        %v388 = vld [vmem:[%s329 + $0xc8] sm:$0xff]
        %v389 = vld [vmem:[%s329 + $0xd0] sm:$0xff]
        %v390 = vld [vmem:[%s329 + $0xd8] sm:$0xff]
        %v391 = vld [vmem:[%s329 + $0xe0] sm:$0xff]
        %v392 = vld [vmem:[%s329 + $0xe8] sm:$0xff]
        %v393 = vld [vmem:[%s329 + $0xf0] sm:$0xff]
        %v394 = vld [vmem:[%s329 + $0xf8] sm:$0xff]
        %v395 = vld [vmem:[#allocation2] sm:$0xff]
        %v396 = vld [vmem:[#allocation2 + $0x8] sm:$0xff]
        %v397 = vld [vmem:[#allocation2 + $0x10] sm:$0xff]
        %v398 = vld [vmem:[#allocation2 + $0x18] sm:$0xff]
        %v399 = vld [vmem:[#allocation2 + $0x20] sm:$0xff]
        %v400 = vld [vmem:[#allocation2 + $0x28] sm:$0xff]
        %v401 = vld [vmem:[#allocation2 + $0x30] sm:$0xff]
        %v402 = vld [vmem:[#allocation2 + $0x38] sm:$0xff]
        %v403 = vld [vmem:[#allocation2 + $0x40] sm:$0xff]
        %v404 = vld [vmem:[#allocation2 + $0x48] sm:$0xff]
        %v405 = vld [vmem:[#allocation2 + $0x50] sm:$0xff]
        %v406 = vld [vmem:[#allocation2 + $0x58] sm:$0xff]
        %v407 = vld [vmem:[#allocation2 + $0x60] sm:$0xff]
        %v408 = vld [vmem:[#allocation2 + $0x68] sm:$0xff]
        %v409 = vld [vmem:[#allocation2 + $0x70] sm:$0xff]
        %v410 = vld [vmem:[#allocation2 + $0x78] sm:$0xff]
        %v411 = vld [vmem:[#allocation2 + $0x80] sm:$0xff]
        %v412 = vld [vmem:[#allocation2 + $0x88] sm:$0xff]
        %v413 = vld [vmem:[#allocation2 + $0x90] sm:$0xff]
        %v414 = vld [vmem:[#allocation2 + $0x98] sm:$0xff]
        %v415 = vld [vmem:[#allocation2 + $0xa0] sm:$0xff]
        %v416 = vld [vmem:[#allocation2 + $0xa8] sm:$0xff]
        %v417 = vld [vmem:[#allocation2 + $0xb0] sm:$0xff]
        %v418 = vld [vmem:[#allocation2 + $0xb8] sm:$0xff]
        %v419 = vld [vmem:[#allocation2 + $0xc0] sm:$0xff]
        %v420 = vld [vmem:[#allocation2 + $0xc8] sm:$0xff]
        %v421 = vld [vmem:[#allocation2 + $0xd0] sm:$0xff]
        %v422 = vld [vmem:[#allocation2 + $0xd8] sm:$0xff]
        %v423 = vld [vmem:[#allocation2 + $0xe0] sm:$0xff]
        %v424 = vld [vmem:[#allocation2 + $0xe8] sm:$0xff]
        %v425 = vld [vmem:[#allocation2 + $0xf0] sm:$0xff]
        %v426 = vld [vmem:[#allocation2 + $0xf8] sm:$0xff]
        %v427 = vld [vmem:[#allocation5] sm:$0x3]
        %v429 = vperm.slane %v427, 0
        %v430 = vperm.slane %v427, 1
        %433 = vmatpush.msra.mxu0 %v425
        %434 = vmatpush.msra.mxu0 %v423
        %435 = vmatpush.msra.mxu0 %v421
        %436 = vmatpush.msra.mxu0 %v419
        %437 = vmatpush.msra.mxu0 %v417
        %438 = vmatpush.msra.mxu0 %v415
        %439 = vmatpush.msra.mxu0 %v413
        %440 = vmatpush.msra.mxu0 %v411
        %441 = vmatpush.msra.mxu0 %v409
        %442 = vmatpush.msra.mxu0 %v407
        %443 = vmatpush.msra.mxu0 %v405
        %444 = vmatpush.msra.mxu0 %v403
        %445 = vmatpush.msra.mxu0 %v401
        %446 = vmatpush.msra.mxu0 %v399
        %447 = vmatpush.msra.mxu0 %v397
        %448 = vmatpush.msra.mxu0 %v395
        %449 = vmatmul.f32.gmra.mxu0 %v363
        %v450 = vpop.f32.mrf.mxu0
        %v451 = vadd.f32 %v429, %v450
        %452 = vmatmul.f32.gmra.mxu0 %v364
        %v453 = vpop.f32.mrf.mxu0
        %v454 = vadd.f32 %v429, %v453
        %455 = vmatmul.f32.gmra.mxu0 %v365
        %v456 = vpop.f32.mrf.mxu0
        %v457 = vadd.f32 %v429, %v456
        %458 = vmatmul.f32.gmra.mxu0 %v366
        %v459 = vpop.f32.mrf.mxu0
        %v460 = vadd.f32 %v429, %v459
        %461 = vmatmul.f32.gmra.mxu0 %v367
        %v462 = vpop.f32.mrf.mxu0
        %v463 = vadd.f32 %v429, %v462
        %464 = vmatmul.f32.gmra.mxu0 %v368
        %v465 = vpop.f32.mrf.mxu0
        %v466 = vadd.f32 %v429, %v465
        %467 = vmatmul.f32.gmra.mxu0 %v369
        %v468 = vpop.f32.mrf.mxu0
        %v469 = vadd.f32 %v429, %v468
        %470 = vmatmul.f32.gmra.mxu0 %v370
        %v471 = vpop.f32.mrf.mxu0
        %v472 = vadd.f32 %v429, %v471
        %473 = vmatmul.f32.gmra.mxu0 %v371
        %v474 = vpop.f32.mrf.mxu0
        %v475 = vadd.f32 %v429, %v474
        %476 = vmatmul.f32.gmra.mxu0 %v372
        %v477 = vpop.f32.mrf.mxu0
        %v478 = vadd.f32 %v429, %v477
        %479 = vmatmul.f32.gmra.mxu0 %v373
        %v480 = vpop.f32.mrf.mxu0
        %v481 = vadd.f32 %v429, %v480
        %482 = vmatmul.f32.gmra.mxu0 %v374
        %v483 = vpop.f32.mrf.mxu0
        %v484 = vadd.f32 %v429, %v483
        %485 = vmatmul.f32.gmra.mxu0 %v375
        %v486 = vpop.f32.mrf.mxu0
        %v487 = vadd.f32 %v429, %v486
        %488 = vmatmul.f32.gmra.mxu0 %v376
        %v489 = vpop.f32.mrf.mxu0
        %v490 = vadd.f32 %v429, %v489
        %491 = vmatmul.f32.gmra.mxu0 %v377
        %v492 = vpop.f32.mrf.mxu0
        %v493 = vadd.f32 %v429, %v492
        %494 = vmatmul.f32.gmra.mxu0 %v378
        %v495 = vpop.f32.mrf.mxu0
        %v496 = vadd.f32 %v429, %v495
        %497 = vmatmul.f32.gmra.mxu0 %v379
        %v498 = vpop.f32.mrf.mxu0
        %v499 = vadd.f32 %v429, %v498
        %500 = vmatmul.f32.gmra.mxu0 %v380
        %v501 = vpop.f32.mrf.mxu0
        %v502 = vadd.f32 %v429, %v501
        %503 = vmatmul.f32.gmra.mxu0 %v381
        %v504 = vpop.f32.mrf.mxu0
        %v505 = vadd.f32 %v429, %v504
        %506 = vmatmul.f32.gmra.mxu0 %v382
        %v507 = vpop.f32.mrf.mxu0
        %v508 = vadd.f32 %v429, %v507
        %509 = vmatmul.f32.gmra.mxu0 %v383
        %v510 = vpop.f32.mrf.mxu0
        %v511 = vadd.f32 %v429, %v510
        %512 = vmatmul.f32.gmra.mxu0 %v384
        %v513 = vpop.f32.mrf.mxu0
        %v514 = vadd.f32 %v429, %v513
        %515 = vmatmul.f32.gmra.mxu0 %v385
        %v516 = vpop.f32.mrf.mxu0
        %v517 = vadd.f32 %v429, %v516
        %518 = vmatmul.f32.gmra.mxu0 %v386
        %v519 = vpop.f32.mrf.mxu0
        %v520 = vadd.f32 %v429, %v519
        %521 = vmatmul.f32.gmra.mxu0 %v387
        %v522 = vpop.f32.mrf.mxu0
        %v523 = vadd.f32 %v429, %v522
        %524 = vmatmul.f32.gmra.mxu0 %v388
        %v525 = vpop.f32.mrf.mxu0
        %v526 = vadd.f32 %v429, %v525
        %527 = vmatmul.f32.gmra.mxu0 %v389
        %v528 = vpop.f32.mrf.mxu0
        %v529 = vadd.f32 %v429, %v528
        %530 = vmatmul.f32.gmra.mxu0 %v390
        %v531 = vpop.f32.mrf.mxu0
        %v532 = vadd.f32 %v429, %v531
        %533 = vmatmul.f32.gmra.mxu0 %v391
        %v534 = vpop.f32.mrf.mxu0
        %v535 = vadd.f32 %v429, %v534
        %536 = vmatmul.f32.gmra.mxu0 %v392
        %v537 = vpop.f32.mrf.mxu0
        %v538 = vadd.f32 %v429, %v537
        %539 = vmatmul.f32.gmra.mxu0 %v393
        %v540 = vpop.f32.mrf.mxu0
        %v541 = vadd.f32 %v429, %v540
        %542 = vmatmul.f32.gmra.mxu0 %v394
        %v543 = vpop.f32.mrf.mxu0
        %v544 = vadd.f32 %v429, %v543
        %545 = vdwg.mxu0
        %546 = vmatpush.msra.mxu0 %v426
        %547 = vmatpush.msra.mxu0 %v424
        %548 = vmatpush.msra.mxu0 %v422
        %549 = vmatpush.msra.mxu0 %v420
        %550 = vmatpush.msra.mxu0 %v418
        %551 = vmatpush.msra.mxu0 %v416
        %552 = vmatpush.msra.mxu0 %v414
        %553 = vmatpush.msra.mxu0 %v412
        %554 = vmatpush.msra.mxu0 %v410
        %555 = vmatpush.msra.mxu0 %v408
        %556 = vmatpush.msra.mxu0 %v406
        %557 = vmatpush.msra.mxu0 %v404
        %558 = vmatpush.msra.mxu0 %v402
        %559 = vmatpush.msra.mxu0 %v400
        %560 = vmatpush.msra.mxu0 %v398
        %561 = vmatpush.msra.mxu0 %v396
        %562 = vmatmul.f32.gmra.mxu0 %v363
        %v563 = vpop.f32.mrf.mxu0
        %v564 = vadd.f32 %v430, %v563
        %565 = vmatmul.f32.gmra.mxu0 %v364
        %v566 = vpop.f32.mrf.mxu0
        %v567 = vadd.f32 %v430, %v566
        %568 = vmatmul.f32.gmra.mxu0 %v365
        %v569 = vpop.f32.mrf.mxu0
        %v570 = vadd.f32 %v430, %v569
        %571 = vmatmul.f32.gmra.mxu0 %v366
        %v572 = vpop.f32.mrf.mxu0
        %v573 = vadd.f32 %v430, %v572
        %574 = vmatmul.f32.gmra.mxu0 %v367
        %v575 = vpop.f32.mrf.mxu0
        %v576 = vadd.f32 %v430, %v575
        %577 = vmatmul.f32.gmra.mxu0 %v368
        %v578 = vpop.f32.mrf.mxu0
        %v579 = vadd.f32 %v430, %v578
        %580 = vmatmul.f32.gmra.mxu0 %v369
        %v581 = vpop.f32.mrf.mxu0
        %v582 = vadd.f32 %v430, %v581
        %583 = vmatmul.f32.gmra.mxu0 %v370
        %v584 = vpop.f32.mrf.mxu0
        %v585 = vadd.f32 %v430, %v584
        %586 = vmatmul.f32.gmra.mxu0 %v371
        %v587 = vpop.f32.mrf.mxu0
        %v588 = vadd.f32 %v430, %v587
        %589 = vmatmul.f32.gmra.mxu0 %v372
        %v590 = vpop.f32.mrf.mxu0
        %v591 = vadd.f32 %v430, %v590
        %592 = vmatmul.f32.gmra.mxu0 %v373
        %v593 = vpop.f32.mrf.mxu0
        %v594 = vadd.f32 %v430, %v593
        %595 = vmatmul.f32.gmra.mxu0 %v374
        %v596 = vpop.f32.mrf.mxu0
        %v597 = vadd.f32 %v430, %v596
        %598 = vmatmul.f32.gmra.mxu0 %v375
        %v599 = vpop.f32.mrf.mxu0
        %v600 = vadd.f32 %v430, %v599
        %601 = vmatmul.f32.gmra.mxu0 %v376
        %v602 = vpop.f32.mrf.mxu0
        %v603 = vadd.f32 %v430, %v602
        %604 = vmatmul.f32.gmra.mxu0 %v377
        %v605 = vpop.f32.mrf.mxu0
        %v606 = vadd.f32 %v430, %v605
        %607 = vmatmul.f32.gmra.mxu0 %v378
        %v608 = vpop.f32.mrf.mxu0
        %v609 = vadd.f32 %v430, %v608
        %610 = vmatmul.f32.gmra.mxu0 %v379
        %v611 = vpop.f32.mrf.mxu0
        %v612 = vadd.f32 %v430, %v611
        %613 = vmatmul.f32.gmra.mxu0 %v380
        %v614 = vpop.f32.mrf.mxu0
        %v615 = vadd.f32 %v430, %v614
        %616 = vmatmul.f32.gmra.mxu0 %v381
        %v617 = vpop.f32.mrf.mxu0
        %v618 = vadd.f32 %v430, %v617
        %619 = vmatmul.f32.gmra.mxu0 %v382
        %v620 = vpop.f32.mrf.mxu0
        %v621 = vadd.f32 %v430, %v620
        %622 = vmatmul.f32.gmra.mxu0 %v383
        %v623 = vpop.f32.mrf.mxu0
        %v624 = vadd.f32 %v430, %v623
        %625 = vmatmul.f32.gmra.mxu0 %v384
        %v626 = vpop.f32.mrf.mxu0
        %v627 = vadd.f32 %v430, %v626
        %628 = vmatmul.f32.gmra.mxu0 %v385
        %v629 = vpop.f32.mrf.mxu0
        %v630 = vadd.f32 %v430, %v629
        %631 = vmatmul.f32.gmra.mxu0 %v386
        %v632 = vpop.f32.mrf.mxu0
        %v633 = vadd.f32 %v430, %v632
        %634 = vmatmul.f32.gmra.mxu0 %v387
        %v635 = vpop.f32.mrf.mxu0
        %v636 = vadd.f32 %v430, %v635
        %637 = vmatmul.f32.gmra.mxu0 %v388
        %v638 = vpop.f32.mrf.mxu0
        %v639 = vadd.f32 %v430, %v638
        %640 = vmatmul.f32.gmra.mxu0 %v389
        %v641 = vpop.f32.mrf.mxu0
        %v642 = vadd.f32 %v430, %v641
        %643 = vmatmul.f32.gmra.mxu0 %v390
        %v644 = vpop.f32.mrf.mxu0
        %v645 = vadd.f32 %v430, %v644
        %646 = vmatmul.f32.gmra.mxu0 %v391
        %v647 = vpop.f32.mrf.mxu0
        %v648 = vadd.f32 %v430, %v647
        %649 = vmatmul.f32.gmra.mxu0 %v392
        %v650 = vpop.f32.mrf.mxu0
        %v651 = vadd.f32 %v430, %v650
        %652 = vmatmul.f32.gmra.mxu0 %v393
        %v653 = vpop.f32.mrf.mxu0
        %v654 = vadd.f32 %v430, %v653
        %655 = vmatmul.f32.gmra.mxu0 %v394
        %v656 = vpop.f32.mrf.mxu0
        %v657 = vadd.f32 %v430, %v656
        %658 = vdwg.mxu0
        %v659 = vmax.f32 %v451, 0.0
        %v660 = vmax.f32 %v564, 0.0
        %v661 = vmax.f32 %v454, 0.0
        %v662 = vmax.f32 %v567, 0.0
        %v663 = vmax.f32 %v457, 0.0
        %v664 = vmax.f32 %v570, 0.0
        %v665 = vmax.f32 %v460, 0.0
        %v666 = vmax.f32 %v573, 0.0
        %v667 = vmax.f32 %v463, 0.0
        %v668 = vmax.f32 %v576, 0.0
        %v669 = vmax.f32 %v466, 0.0
        %v670 = vmax.f32 %v579, 0.0
        %v671 = vmax.f32 %v469, 0.0
        %v672 = vmax.f32 %v582, 0.0
        %v673 = vmax.f32 %v472, 0.0
        %v674 = vmax.f32 %v585, 0.0
        %v675 = vmax.f32 %v475, 0.0
        %v676 = vmax.f32 %v588, 0.0
        %v677 = vmax.f32 %v478, 0.0
        %v678 = vmax.f32 %v591, 0.0
        %v679 = vmax.f32 %v481, 0.0
        %v680 = vmax.f32 %v594, 0.0
        %v681 = vmax.f32 %v484, 0.0
        %v682 = vmax.f32 %v597, 0.0
        %v683 = vmax.f32 %v487, 0.0
        %v684 = vmax.f32 %v600, 0.0
        %v685 = vmax.f32 %v490, 0.0
        %v686 = vmax.f32 %v603, 0.0
        %v687 = vmax.f32 %v493, 0.0
        %v688 = vmax.f32 %v606, 0.0
        %v689 = vmax.f32 %v496, 0.0
        %v690 = vmax.f32 %v609, 0.0
        %v691 = vmax.f32 %v499, 0.0
        %v692 = vmax.f32 %v612, 0.0
        %v693 = vmax.f32 %v502, 0.0
        %v694 = vmax.f32 %v615, 0.0
        %v695 = vmax.f32 %v505, 0.0
        %v696 = vmax.f32 %v618, 0.0
        %v697 = vmax.f32 %v508, 0.0
        %v698 = vmax.f32 %v621, 0.0
        %v699 = vmax.f32 %v511, 0.0
        %v700 = vmax.f32 %v624, 0.0
        %v701 = vmax.f32 %v514, 0.0
        %v702 = vmax.f32 %v627, 0.0
        %v703 = vmax.f32 %v517, 0.0
        %v704 = vmax.f32 %v630, 0.0
        %v705 = vmax.f32 %v520, 0.0
        %v706 = vmax.f32 %v633, 0.0
        %v707 = vmax.f32 %v523, 0.0
        %v708 = vmax.f32 %v636, 0.0
        %v709 = vmax.f32 %v526, 0.0
        %v710 = vmax.f32 %v639, 0.0
        %v711 = vmax.f32 %v529, 0.0
        %v712 = vmax.f32 %v642, 0.0
        %v713 = vmax.f32 %v532, 0.0
        %v714 = vmax.f32 %v645, 0.0
        %v715 = vmax.f32 %v535, 0.0
        %v716 = vmax.f32 %v648, 0.0
        %v717 = vmax.f32 %v538, 0.0
        %v718 = vmax.f32 %v651, 0.0
        %v719 = vmax.f32 %v541, 0.0
        %v720 = vmax.f32 %v654, 0.0
        %v721 = vmax.f32 %v544, 0.0
        %v722 = vmax.f32 %v657, 0.0
        %v723 = vld [vmem:[#allocation7] sm:$0xff]
        %v724 = vld [vmem:[#allocation7 + $0x8] sm:$0xff]
        %v725 = vld [vmem:[#allocation7 + $0x10] sm:$0xff]
        %v726 = vld [vmem:[#allocation7 + $0x18] sm:$0xff]
        %v727 = vld [vmem:[#allocation7 + $0x20] sm:$0xff]
        %v728 = vld [vmem:[#allocation7 + $0x28] sm:$0xff]
        %v729 = vld [vmem:[#allocation7 + $0x30] sm:$0xff]
        %v730 = vld [vmem:[#allocation7 + $0x38] sm:$0xff]
        %v731 = vld [vmem:[#allocation7 + $0x40] sm:$0xff]
        %v732 = vld [vmem:[#allocation7 + $0x48] sm:$0xff]
        %v733 = vld [vmem:[#allocation7 + $0x50] sm:$0xff]
        %v734 = vld [vmem:[#allocation7 + $0x58] sm:$0xff]
        %v735 = vld [vmem:[#allocation7 + $0x60] sm:$0xff]
        %v736 = vld [vmem:[#allocation7 + $0x68] sm:$0xff]
        %v737 = vld [vmem:[#allocation7 + $0x70] sm:$0xff]
        %v738 = vld [vmem:[#allocation7 + $0x78] sm:$0xff]
        %v739 = vld [vmem:[#allocation7 + $0x80] sm:$0xff]
        %v740 = vld [vmem:[#allocation7 + $0x88] sm:$0xff]
        %v741 = vld [vmem:[#allocation7 + $0x90] sm:$0xff]
        %v742 = vld [vmem:[#allocation7 + $0x98] sm:$0xff]
        %v743 = vld [vmem:[#allocation7 + $0xa0] sm:$0xff]
        %v744 = vld [vmem:[#allocation7 + $0xa8] sm:$0xff]
        %v745 = vld [vmem:[#allocation7 + $0xb0] sm:$0xff]
        %v746 = vld [vmem:[#allocation7 + $0xb8] sm:$0xff]
        %v747 = vld [vmem:[#allocation7 + $0xc0] sm:$0xff]
        %v748 = vld [vmem:[#allocation7 + $0xc8] sm:$0xff]
        %v749 = vld [vmem:[#allocation7 + $0xd0] sm:$0xff]
        %v750 = vld [vmem:[#allocation7 + $0xd8] sm:$0xff]
        %v751 = vld [vmem:[#allocation7 + $0xe0] sm:$0xff]
        %v752 = vld [vmem:[#allocation7 + $0xe8] sm:$0xff]
        %v753 = vld [vmem:[#allocation7 + $0xf0] sm:$0xff]
        %v754 = vld [vmem:[#allocation7 + $0xf8] sm:$0xff]
        %v755 = vld [vmem:[#allocation7 + $0x100] sm:$0xff]
        %v756 = vld [vmem:[#allocation7 + $0x108] sm:$0xff]
        %v757 = vld [vmem:[#allocation7 + $0x110] sm:$0xff]
        %v758 = vld [vmem:[#allocation7 + $0x118] sm:$0xff]
        %v759 = vld [vmem:[#allocation7 + $0x120] sm:$0xff]
        %v760 = vld [vmem:[#allocation7 + $0x128] sm:$0xff]
        %v761 = vld [vmem:[#allocation7 + $0x130] sm:$0xff]
        %v762 = vld [vmem:[#allocation7 + $0x138] sm:$0xff]
        %v763 = vld [vmem:[#allocation7 + $0x140] sm:$0xff]
        %v764 = vld [vmem:[#allocation7 + $0x148] sm:$0xff]
        %v765 = vld [vmem:[#allocation7 + $0x150] sm:$0xff]
        %v766 = vld [vmem:[#allocation7 + $0x158] sm:$0xff]
        %v767 = vld [vmem:[#allocation7 + $0x160] sm:$0xff]
        %v768 = vld [vmem:[#allocation7 + $0x168] sm:$0xff]
        %v769 = vld [vmem:[#allocation7 + $0x170] sm:$0xff]
        %v770 = vld [vmem:[#allocation7 + $0x178] sm:$0xff]
        %v771 = vld [vmem:[#allocation7 + $0x180] sm:$0xff]
        %v772 = vld [vmem:[#allocation7 + $0x188] sm:$0xff]
        %v773 = vld [vmem:[#allocation7 + $0x190] sm:$0xff]
        %v774 = vld [vmem:[#allocation7 + $0x198] sm:$0xff]
        %v775 = vld [vmem:[#allocation7 + $0x1a0] sm:$0xff]
        %v776 = vld [vmem:[#allocation7 + $0x1a8] sm:$0xff]
        %v777 = vld [vmem:[#allocation7 + $0x1b0] sm:$0xff]
        %v778 = vld [vmem:[#allocation7 + $0x1b8] sm:$0xff]
        %v779 = vld [vmem:[#allocation7 + $0x1c0] sm:$0xff]
        %v780 = vld [vmem:[#allocation7 + $0x1c8] sm:$0xff]
        %v781 = vld [vmem:[#allocation7 + $0x1d0] sm:$0xff]
        %v782 = vld [vmem:[#allocation7 + $0x1d8] sm:$0xff]
        %v783 = vld [vmem:[#allocation7 + $0x1e0] sm:$0xff]
        %v784 = vld [vmem:[#allocation7 + $0x1e8] sm:$0xff]
        %v785 = vld [vmem:[#allocation7 + $0x1f0] sm:$0xff]
        %v786 = vld [vmem:[#allocation7 + $0x1f8] sm:$0xff]
        %v787 = vld [vmem:[%s3] sm:$0x3]
        %v789 = vperm.slane %v787, 0
        %v790 = vperm.slane %v787, 1
        %793 = vmatpush.msra.mxu0 %v753
        %794 = vmatpush.msra.mxu0 %v751
        %795 = vmatpush.msra.mxu0 %v749
        %796 = vmatpush.msra.mxu0 %v747
        %797 = vmatpush.msra.mxu0 %v745
        %798 = vmatpush.msra.mxu0 %v743
        %799 = vmatpush.msra.mxu0 %v741
        %800 = vmatpush.msra.mxu0 %v739
        %801 = vmatpush.msra.mxu0 %v737
        %802 = vmatpush.msra.mxu0 %v735
        %803 = vmatpush.msra.mxu0 %v733
        %804 = vmatpush.msra.mxu0 %v731
        %805 = vmatpush.msra.mxu0 %v729
        %806 = vmatpush.msra.mxu0 %v727
        %807 = vmatpush.msra.mxu0 %v725
        %808 = vmatpush.msra.mxu0 %v723
        %809 = vmatmul.f32.gmra.mxu0 %v659
        %v810 = vpop.f32.mrf.mxu0
        %v811 = vadd.f32 %v789, %v810
        %812 = vmatmul.f32.gmra.mxu0 %v661
        %v813 = vpop.f32.mrf.mxu0
        %v814 = vadd.f32 %v789, %v813
        %815 = vmatmul.f32.gmra.mxu0 %v663
        %v816 = vpop.f32.mrf.mxu0
        %v817 = vadd.f32 %v789, %v816
        %818 = vmatmul.f32.gmra.mxu0 %v665
        %v819 = vpop.f32.mrf.mxu0
        %v820 = vadd.f32 %v789, %v819
        %821 = vmatmul.f32.gmra.mxu0 %v667
        %v822 = vpop.f32.mrf.mxu0
        %v823 = vadd.f32 %v789, %v822
        %824 = vmatmul.f32.gmra.mxu0 %v669
        %v825 = vpop.f32.mrf.mxu0
        %v826 = vadd.f32 %v789, %v825
        %827 = vmatmul.f32.gmra.mxu0 %v671
        %v828 = vpop.f32.mrf.mxu0
        %v829 = vadd.f32 %v789, %v828
        %830 = vmatmul.f32.gmra.mxu0 %v673
        %v831 = vpop.f32.mrf.mxu0
        %v832 = vadd.f32 %v789, %v831
        %833 = vmatmul.f32.gmra.mxu0 %v675
        %v834 = vpop.f32.mrf.mxu0
        %v835 = vadd.f32 %v789, %v834
        %836 = vmatmul.f32.gmra.mxu0 %v677
        %v837 = vpop.f32.mrf.mxu0
        %v838 = vadd.f32 %v789, %v837
        %839 = vmatmul.f32.gmra.mxu0 %v679
        %v840 = vpop.f32.mrf.mxu0
        %v841 = vadd.f32 %v789, %v840
        %842 = vmatmul.f32.gmra.mxu0 %v681
        %v843 = vpop.f32.mrf.mxu0
        %v844 = vadd.f32 %v789, %v843
        %845 = vmatmul.f32.gmra.mxu0 %v683
        %v846 = vpop.f32.mrf.mxu0
        %v847 = vadd.f32 %v789, %v846
        %848 = vmatmul.f32.gmra.mxu0 %v685
        %v849 = vpop.f32.mrf.mxu0
        %v850 = vadd.f32 %v789, %v849
        %851 = vmatmul.f32.gmra.mxu0 %v687
        %v852 = vpop.f32.mrf.mxu0
        %v853 = vadd.f32 %v789, %v852
        %854 = vmatmul.f32.gmra.mxu0 %v689
        %v855 = vpop.f32.mrf.mxu0
        %v856 = vadd.f32 %v789, %v855
        %857 = vmatmul.f32.gmra.mxu0 %v691
        %v858 = vpop.f32.mrf.mxu0
        %v859 = vadd.f32 %v789, %v858
        %860 = vmatmul.f32.gmra.mxu0 %v693
        %v861 = vpop.f32.mrf.mxu0
        %v862 = vadd.f32 %v789, %v861
        %863 = vmatmul.f32.gmra.mxu0 %v695
        %v864 = vpop.f32.mrf.mxu0
        %v865 = vadd.f32 %v789, %v864
        %866 = vmatmul.f32.gmra.mxu0 %v697
        %v867 = vpop.f32.mrf.mxu0
        %v868 = vadd.f32 %v789, %v867
        %869 = vmatmul.f32.gmra.mxu0 %v699
        %v870 = vpop.f32.mrf.mxu0
        %v871 = vadd.f32 %v789, %v870
        %872 = vmatmul.f32.gmra.mxu0 %v701
        %v873 = vpop.f32.mrf.mxu0
        %v874 = vadd.f32 %v789, %v873
        %875 = vmatmul.f32.gmra.mxu0 %v703
        %v876 = vpop.f32.mrf.mxu0
        %v877 = vadd.f32 %v789, %v876
        %878 = vmatmul.f32.gmra.mxu0 %v705
        %v879 = vpop.f32.mrf.mxu0
        %v880 = vadd.f32 %v789, %v879
        %881 = vmatmul.f32.gmra.mxu0 %v707
        %v882 = vpop.f32.mrf.mxu0
        %v883 = vadd.f32 %v789, %v882
        %884 = vmatmul.f32.gmra.mxu0 %v709
        %v885 = vpop.f32.mrf.mxu0
        %v886 = vadd.f32 %v789, %v885
        %887 = vmatmul.f32.gmra.mxu0 %v711
        %v888 = vpop.f32.mrf.mxu0
        %v889 = vadd.f32 %v789, %v888
        %890 = vmatmul.f32.gmra.mxu0 %v713
        %v891 = vpop.f32.mrf.mxu0
        %v892 = vadd.f32 %v789, %v891
        %893 = vmatmul.f32.gmra.mxu0 %v715
        %v894 = vpop.f32.mrf.mxu0
        %v895 = vadd.f32 %v789, %v894
        %896 = vmatmul.f32.gmra.mxu0 %v717
        %v897 = vpop.f32.mrf.mxu0
        %v898 = vadd.f32 %v789, %v897
        %899 = vmatmul.f32.gmra.mxu0 %v719
        %v900 = vpop.f32.mrf.mxu0
        %v901 = vadd.f32 %v789, %v900
        %902 = vmatmul.f32.gmra.mxu0 %v721
        %v903 = vpop.f32.mrf.mxu0
        %v904 = vadd.f32 %v789, %v903
        %905 = vdwg.mxu0
        %906 = vmatpush.msra.mxu0 %v785
        %907 = vmatpush.msra.mxu0 %v783
        %908 = vmatpush.msra.mxu0 %v781
        %909 = vmatpush.msra.mxu0 %v779
        %910 = vmatpush.msra.mxu0 %v777
        %911 = vmatpush.msra.mxu0 %v775
        %912 = vmatpush.msra.mxu0 %v773
        %913 = vmatpush.msra.mxu0 %v771
        %914 = vmatpush.msra.mxu0 %v769
        %915 = vmatpush.msra.mxu0 %v767
        %916 = vmatpush.msra.mxu0 %v765
        %917 = vmatpush.msra.mxu0 %v763
        %918 = vmatpush.msra.mxu0 %v761
        %919 = vmatpush.msra.mxu0 %v759
        %920 = vmatpush.msra.mxu0 %v757
        %921 = vmatpush.msra.mxu0 %v755
        %922 = vmatmul.f32.gmra.mxu0 %v660
        %v923 = vpop.f32.mrf.mxu0
        %v924 = vadd.f32 %v811, %v923
        %925 = vmatmul.f32.gmra.mxu0 %v662
        %v926 = vpop.f32.mrf.mxu0
        %v927 = vadd.f32 %v814, %v926
        %928 = vmatmul.f32.gmra.mxu0 %v664
        %v929 = vpop.f32.mrf.mxu0
        %v930 = vadd.f32 %v817, %v929
        %931 = vmatmul.f32.gmra.mxu0 %v666
        %v932 = vpop.f32.mrf.mxu0
        %v933 = vadd.f32 %v820, %v932
        %934 = vmatmul.f32.gmra.mxu0 %v668
        %v935 = vpop.f32.mrf.mxu0
        %v936 = vadd.f32 %v823, %v935
        %937 = vmatmul.f32.gmra.mxu0 %v670
        %v938 = vpop.f32.mrf.mxu0
        %v939 = vadd.f32 %v826, %v938
        %940 = vmatmul.f32.gmra.mxu0 %v672
        %v941 = vpop.f32.mrf.mxu0
        %v942 = vadd.f32 %v829, %v941
        %943 = vmatmul.f32.gmra.mxu0 %v674
        %v944 = vpop.f32.mrf.mxu0
        %v945 = vadd.f32 %v832, %v944
        %946 = vmatmul.f32.gmra.mxu0 %v676
        %v947 = vpop.f32.mrf.mxu0
        %v948 = vadd.f32 %v835, %v947
        %949 = vmatmul.f32.gmra.mxu0 %v678
        %v950 = vpop.f32.mrf.mxu0
        %v951 = vadd.f32 %v838, %v950
        %952 = vmatmul.f32.gmra.mxu0 %v680
        %v953 = vpop.f32.mrf.mxu0
        %v954 = vadd.f32 %v841, %v953
        %955 = vmatmul.f32.gmra.mxu0 %v682
        %v956 = vpop.f32.mrf.mxu0
        %v957 = vadd.f32 %v844, %v956
        %958 = vmatmul.f32.gmra.mxu0 %v684
        %v959 = vpop.f32.mrf.mxu0
        %v960 = vadd.f32 %v847, %v959
        %961 = vmatmul.f32.gmra.mxu0 %v686
        %v962 = vpop.f32.mrf.mxu0
        %v963 = vadd.f32 %v850, %v962
        %964 = vmatmul.f32.gmra.mxu0 %v688
        %v965 = vpop.f32.mrf.mxu0
        %v966 = vadd.f32 %v853, %v965
        %967 = vmatmul.f32.gmra.mxu0 %v690
        %v968 = vpop.f32.mrf.mxu0
        %v969 = vadd.f32 %v856, %v968
        %970 = vmatmul.f32.gmra.mxu0 %v692
        %v971 = vpop.f32.mrf.mxu0
        %v972 = vadd.f32 %v859, %v971
        %973 = vmatmul.f32.gmra.mxu0 %v694
        %v974 = vpop.f32.mrf.mxu0
        %v975 = vadd.f32 %v862, %v974
        %976 = vmatmul.f32.gmra.mxu0 %v696
        %v977 = vpop.f32.mrf.mxu0
        %v978 = vadd.f32 %v865, %v977
        %979 = vmatmul.f32.gmra.mxu0 %v698
        %v980 = vpop.f32.mrf.mxu0
        %v981 = vadd.f32 %v868, %v980
        %982 = vmatmul.f32.gmra.mxu0 %v700
        %v983 = vpop.f32.mrf.mxu0
        %v984 = vadd.f32 %v871, %v983
        %985 = vmatmul.f32.gmra.mxu0 %v702
        %v986 = vpop.f32.mrf.mxu0
        %v987 = vadd.f32 %v874, %v986
        %988 = vmatmul.f32.gmra.mxu0 %v704
        %v989 = vpop.f32.mrf.mxu0
        %v990 = vadd.f32 %v877, %v989
        %991 = vmatmul.f32.gmra.mxu0 %v706
        %v992 = vpop.f32.mrf.mxu0
        %v993 = vadd.f32 %v880, %v992
        %994 = vmatmul.f32.gmra.mxu0 %v708
        %v995 = vpop.f32.mrf.mxu0
        %v996 = vadd.f32 %v883, %v995
        %997 = vmatmul.f32.gmra.mxu0 %v710
        %v998 = vpop.f32.mrf.mxu0
        %v999 = vadd.f32 %v886, %v998
        %1000 = vmatmul.f32.gmra.mxu0 %v712
        %v1001 = vpop.f32.mrf.mxu0
        %v1002 = vadd.f32 %v889, %v1001
        %1003 = vmatmul.f32.gmra.mxu0 %v714
        %v1004 = vpop.f32.mrf.mxu0
        %v1005 = vadd.f32 %v892, %v1004
        %1006 = vmatmul.f32.gmra.mxu0 %v716
        %v1007 = vpop.f32.mrf.mxu0
        %v1008 = vadd.f32 %v895, %v1007
        %1009 = vmatmul.f32.gmra.mxu0 %v718
        %v1010 = vpop.f32.mrf.mxu0
        %v1011 = vadd.f32 %v898, %v1010
        %1012 = vmatmul.f32.gmra.mxu0 %v720
        %v1013 = vpop.f32.mrf.mxu0
        %v1014 = vadd.f32 %v901, %v1013
        %1015 = vmatmul.f32.gmra.mxu0 %v722
        %v1016 = vpop.f32.mrf.mxu0
        %v1017 = vadd.f32 %v904, %v1016
        %1018 = vdwg.mxu0
        %1019 = vmatpush.msra.mxu0 %v754
        %1020 = vmatpush.msra.mxu0 %v752
        %1021 = vmatpush.msra.mxu0 %v750
        %1022 = vmatpush.msra.mxu0 %v748
        %1023 = vmatpush.msra.mxu0 %v746
        %1024 = vmatpush.msra.mxu0 %v744
        %1025 = vmatpush.msra.mxu0 %v742
        %1026 = vmatpush.msra.mxu0 %v740
        %1027 = vmatpush.msra.mxu0 %v738
        %1028 = vmatpush.msra.mxu0 %v736
        %1029 = vmatpush.msra.mxu0 %v734
        %1030 = vmatpush.msra.mxu0 %v732
        %1031 = vmatpush.msra.mxu0 %v730
        %1032 = vmatpush.msra.mxu0 %v728
        %1033 = vmatpush.msra.mxu0 %v726
        %1034 = vmatpush.msra.mxu0 %v724
        %1035 = vmatmul.f32.gmra.mxu0 %v659
        %v1036 = vpop.f32.mrf.mxu0
        %v1037 = vadd.f32 %v790, %v1036
        %1038 = vmatmul.f32.gmra.mxu0 %v661
        %v1039 = vpop.f32.mrf.mxu0
        %v1040 = vadd.f32 %v790, %v1039
        %1041 = vmatmul.f32.gmra.mxu0 %v663
        %v1042 = vpop.f32.mrf.mxu0
        %v1043 = vadd.f32 %v790, %v1042
        %1044 = vmatmul.f32.gmra.mxu0 %v665
        %v1045 = vpop.f32.mrf.mxu0
        %v1046 = vadd.f32 %v790, %v1045
        %1047 = vmatmul.f32.gmra.mxu0 %v667
        %v1048 = vpop.f32.mrf.mxu0
        %v1049 = vadd.f32 %v790, %v1048
        %1050 = vmatmul.f32.gmra.mxu0 %v669
        %v1051 = vpop.f32.mrf.mxu0
        %v1052 = vadd.f32 %v790, %v1051
        %1053 = vmatmul.f32.gmra.mxu0 %v671
        %v1054 = vpop.f32.mrf.mxu0
        %v1055 = vadd.f32 %v790, %v1054
        %1056 = vmatmul.f32.gmra.mxu0 %v673
        %v1057 = vpop.f32.mrf.mxu0
        %v1058 = vadd.f32 %v790, %v1057
        %1059 = vmatmul.f32.gmra.mxu0 %v675
        %v1060 = vpop.f32.mrf.mxu0
        %v1061 = vadd.f32 %v790, %v1060
        %1062 = vmatmul.f32.gmra.mxu0 %v677
        %v1063 = vpop.f32.mrf.mxu0
        %v1064 = vadd.f32 %v790, %v1063
        %1065 = vmatmul.f32.gmra.mxu0 %v679
        %v1066 = vpop.f32.mrf.mxu0
        %v1067 = vadd.f32 %v790, %v1066
        %1068 = vmatmul.f32.gmra.mxu0 %v681
        %v1069 = vpop.f32.mrf.mxu0
        %v1070 = vadd.f32 %v790, %v1069
        %1071 = vmatmul.f32.gmra.mxu0 %v683
        %v1072 = vpop.f32.mrf.mxu0
        %v1073 = vadd.f32 %v790, %v1072
        %1074 = vmatmul.f32.gmra.mxu0 %v685
        %v1075 = vpop.f32.mrf.mxu0
        %v1076 = vadd.f32 %v790, %v1075
        %1077 = vmatmul.f32.gmra.mxu0 %v687
        %v1078 = vpop.f32.mrf.mxu0
        %v1079 = vadd.f32 %v790, %v1078
        %1080 = vmatmul.f32.gmra.mxu0 %v689
        %v1081 = vpop.f32.mrf.mxu0
        %v1082 = vadd.f32 %v790, %v1081
        %1083 = vmatmul.f32.gmra.mxu0 %v691
        %v1084 = vpop.f32.mrf.mxu0
        %v1085 = vadd.f32 %v790, %v1084
        %1086 = vmatmul.f32.gmra.mxu0 %v693
        %v1087 = vpop.f32.mrf.mxu0
        %v1088 = vadd.f32 %v790, %v1087
        %1089 = vmatmul.f32.gmra.mxu0 %v695
        %v1090 = vpop.f32.mrf.mxu0
        %v1091 = vadd.f32 %v790, %v1090
        %1092 = vmatmul.f32.gmra.mxu0 %v697
        %v1093 = vpop.f32.mrf.mxu0
        %v1094 = vadd.f32 %v790, %v1093
        %1095 = vmatmul.f32.gmra.mxu0 %v699
        %v1096 = vpop.f32.mrf.mxu0
        %v1097 = vadd.f32 %v790, %v1096
        %1098 = vmatmul.f32.gmra.mxu0 %v701
        %v1099 = vpop.f32.mrf.mxu0
        %v1100 = vadd.f32 %v790, %v1099
        %1101 = vmatmul.f32.gmra.mxu0 %v703
        %v1102 = vpop.f32.mrf.mxu0
        %v1103 = vadd.f32 %v790, %v1102
        %1104 = vmatmul.f32.gmra.mxu0 %v705
        %v1105 = vpop.f32.mrf.mxu0
        %v1106 = vadd.f32 %v790, %v1105
        %1107 = vmatmul.f32.gmra.mxu0 %v707
        %v1108 = vpop.f32.mrf.mxu0
        %v1109 = vadd.f32 %v790, %v1108
        %1110 = vmatmul.f32.gmra.mxu0 %v709
        %v1111 = vpop.f32.mrf.mxu0
        %v1112 = vadd.f32 %v790, %v1111
        %1113 = vmatmul.f32.gmra.mxu0 %v711
        %v1114 = vpop.f32.mrf.mxu0
        %v1115 = vadd.f32 %v790, %v1114
        %1116 = vmatmul.f32.gmra.mxu0 %v713
        %v1117 = vpop.f32.mrf.mxu0
        %v1118 = vadd.f32 %v790, %v1117
        %1119 = vmatmul.f32.gmra.mxu0 %v715
        %v1120 = vpop.f32.mrf.mxu0
        %v1121 = vadd.f32 %v790, %v1120
        %1122 = vmatmul.f32.gmra.mxu0 %v717
        %v1123 = vpop.f32.mrf.mxu0
        %v1124 = vadd.f32 %v790, %v1123
        %1125 = vmatmul.f32.gmra.mxu0 %v719
        %v1126 = vpop.f32.mrf.mxu0
        %v1127 = vadd.f32 %v790, %v1126
        %1128 = vmatmul.f32.gmra.mxu0 %v721
        %v1129 = vpop.f32.mrf.mxu0
        %v1130 = vadd.f32 %v790, %v1129
        %1131 = vdwg.mxu0
        %1132 = vmatpush.msra.mxu0 %v786
        %1133 = vmatpush.msra.mxu0 %v784
        %1134 = vmatpush.msra.mxu0 %v782
        %1135 = vmatpush.msra.mxu0 %v780
        %1136 = vmatpush.msra.mxu0 %v778
        %1137 = vmatpush.msra.mxu0 %v776
        %1138 = vmatpush.msra.mxu0 %v774
        %1139 = vmatpush.msra.mxu0 %v772
        %1140 = vmatpush.msra.mxu0 %v770
        %1141 = vmatpush.msra.mxu0 %v768
        %1142 = vmatpush.msra.mxu0 %v766
        %1143 = vmatpush.msra.mxu0 %v764
        %1144 = vmatpush.msra.mxu0 %v762
        %1145 = vmatpush.msra.mxu0 %v760
        %1146 = vmatpush.msra.mxu0 %v758
        %1147 = vmatpush.msra.mxu0 %v756
        %1148 = vmatmul.f32.gmra.mxu0 %v660
        %v1149 = vpop.f32.mrf.mxu0
        %v1150 = vadd.f32 %v1037, %v1149
        %1151 = vmatmul.f32.gmra.mxu0 %v662
        %v1152 = vpop.f32.mrf.mxu0
        %v1153 = vadd.f32 %v1040, %v1152
        %1154 = vmatmul.f32.gmra.mxu0 %v664
        %v1155 = vpop.f32.mrf.mxu0
        %v1156 = vadd.f32 %v1043, %v1155
        %1157 = vmatmul.f32.gmra.mxu0 %v666
        %v1158 = vpop.f32.mrf.mxu0
        %v1159 = vadd.f32 %v1046, %v1158
        %1160 = vmatmul.f32.gmra.mxu0 %v668
        %v1161 = vpop.f32.mrf.mxu0
        %v1162 = vadd.f32 %v1049, %v1161
        %1163 = vmatmul.f32.gmra.mxu0 %v670
        %v1164 = vpop.f32.mrf.mxu0
        %v1165 = vadd.f32 %v1052, %v1164
        %1166 = vmatmul.f32.gmra.mxu0 %v672
        %v1167 = vpop.f32.mrf.mxu0
        %v1168 = vadd.f32 %v1055, %v1167
        %1169 = vmatmul.f32.gmra.mxu0 %v674
        %v1170 = vpop.f32.mrf.mxu0
        %v1171 = vadd.f32 %v1058, %v1170
        %1172 = vmatmul.f32.gmra.mxu0 %v676
        %v1173 = vpop.f32.mrf.mxu0
        %v1174 = vadd.f32 %v1061, %v1173
        %1175 = vmatmul.f32.gmra.mxu0 %v678
        %v1176 = vpop.f32.mrf.mxu0
        %v1177 = vadd.f32 %v1064, %v1176
        %1178 = vmatmul.f32.gmra.mxu0 %v680
        %v1179 = vpop.f32.mrf.mxu0
        %v1180 = vadd.f32 %v1067, %v1179
        %1181 = vmatmul.f32.gmra.mxu0 %v682
        %v1182 = vpop.f32.mrf.mxu0
        %v1183 = vadd.f32 %v1070, %v1182
        %1184 = vmatmul.f32.gmra.mxu0 %v684
        %v1185 = vpop.f32.mrf.mxu0
        %v1186 = vadd.f32 %v1073, %v1185
        %1187 = vmatmul.f32.gmra.mxu0 %v686
        %v1188 = vpop.f32.mrf.mxu0
        %v1189 = vadd.f32 %v1076, %v1188
        %1190 = vmatmul.f32.gmra.mxu0 %v688
        %v1191 = vpop.f32.mrf.mxu0
        %v1192 = vadd.f32 %v1079, %v1191
        %1193 = vmatmul.f32.gmra.mxu0 %v690
        %v1194 = vpop.f32.mrf.mxu0
        %v1195 = vadd.f32 %v1082, %v1194
        %1196 = vmatmul.f32.gmra.mxu0 %v692
        %v1197 = vpop.f32.mrf.mxu0
        %v1198 = vadd.f32 %v1085, %v1197
        %1199 = vmatmul.f32.gmra.mxu0 %v694
        %v1200 = vpop.f32.mrf.mxu0
        %v1201 = vadd.f32 %v1088, %v1200
        %1202 = vmatmul.f32.gmra.mxu0 %v696
        %v1203 = vpop.f32.mrf.mxu0
        %v1204 = vadd.f32 %v1091, %v1203
        %1205 = vmatmul.f32.gmra.mxu0 %v698
        %v1206 = vpop.f32.mrf.mxu0
        %v1207 = vadd.f32 %v1094, %v1206
        %1208 = vmatmul.f32.gmra.mxu0 %v700
        %v1209 = vpop.f32.mrf.mxu0
        %v1210 = vadd.f32 %v1097, %v1209
        %1211 = vmatmul.f32.gmra.mxu0 %v702
        %v1212 = vpop.f32.mrf.mxu0
        %v1213 = vadd.f32 %v1100, %v1212
        %1214 = vmatmul.f32.gmra.mxu0 %v704
        %v1215 = vpop.f32.mrf.mxu0
        %v1216 = vadd.f32 %v1103, %v1215
        %1217 = vmatmul.f32.gmra.mxu0 %v706
        %v1218 = vpop.f32.mrf.mxu0
        %v1219 = vadd.f32 %v1106, %v1218
        %1220 = vmatmul.f32.gmra.mxu0 %v708
        %v1221 = vpop.f32.mrf.mxu0
        %v1222 = vadd.f32 %v1109, %v1221
        %1223 = vmatmul.f32.gmra.mxu0 %v710
        %v1224 = vpop.f32.mrf.mxu0
        %v1225 = vadd.f32 %v1112, %v1224
        %1226 = vmatmul.f32.gmra.mxu0 %v712
        %v1227 = vpop.f32.mrf.mxu0
        %v1228 = vadd.f32 %v1115, %v1227
        %1229 = vmatmul.f32.gmra.mxu0 %v714
        %v1230 = vpop.f32.mrf.mxu0
        %v1231 = vadd.f32 %v1118, %v1230
        %1232 = vmatmul.f32.gmra.mxu0 %v716
        %v1233 = vpop.f32.mrf.mxu0
        %v1234 = vadd.f32 %v1121, %v1233
        %1235 = vmatmul.f32.gmra.mxu0 %v718
        %v1236 = vpop.f32.mrf.mxu0
        %v1237 = vadd.f32 %v1124, %v1236
        %1238 = vmatmul.f32.gmra.mxu0 %v720
        %v1239 = vpop.f32.mrf.mxu0
        %v1240 = vadd.f32 %v1127, %v1239
        %1241 = vmatmul.f32.gmra.mxu0 %v722
        %v1242 = vpop.f32.mrf.mxu0
        %v1243 = vadd.f32 %v1130, %v1242
        %1244 = vdwg.mxu0
        %v1245 = vmax.f32 %v924, 0.0
        %v1246 = vmax.f32 %v1150, 0.0
        %v1247 = vmax.f32 %v927, 0.0
        %v1248 = vmax.f32 %v1153, 0.0
        %v1249 = vmax.f32 %v930, 0.0
        %v1250 = vmax.f32 %v1156, 0.0
        %v1251 = vmax.f32 %v933, 0.0
        %v1252 = vmax.f32 %v1159, 0.0
        %v1253 = vmax.f32 %v936, 0.0
        %v1254 = vmax.f32 %v1162, 0.0
        %v1255 = vmax.f32 %v939, 0.0
        %v1256 = vmax.f32 %v1165, 0.0
        %v1257 = vmax.f32 %v942, 0.0
        %v1258 = vmax.f32 %v1168, 0.0
        %v1259 = vmax.f32 %v945, 0.0
        %v1260 = vmax.f32 %v1171, 0.0
        %v1261 = vmax.f32 %v948, 0.0
        %v1262 = vmax.f32 %v1174, 0.0
        %v1263 = vmax.f32 %v951, 0.0
        %v1264 = vmax.f32 %v1177, 0.0
        %v1265 = vmax.f32 %v954, 0.0
        %v1266 = vmax.f32 %v1180, 0.0
        %v1267 = vmax.f32 %v957, 0.0
        %v1268 = vmax.f32 %v1183, 0.0
        %v1269 = vmax.f32 %v960, 0.0
        %v1270 = vmax.f32 %v1186, 0.0
        %v1271 = vmax.f32 %v963, 0.0
        %v1272 = vmax.f32 %v1189, 0.0
        %v1273 = vmax.f32 %v966, 0.0
        %v1274 = vmax.f32 %v1192, 0.0
        %v1275 = vmax.f32 %v969, 0.0
        %v1276 = vmax.f32 %v1195, 0.0
        %v1277 = vmax.f32 %v972, 0.0
        %v1278 = vmax.f32 %v1198, 0.0
        %v1279 = vmax.f32 %v975, 0.0
        %v1280 = vmax.f32 %v1201, 0.0
        %v1281 = vmax.f32 %v978, 0.0
        %v1282 = vmax.f32 %v1204, 0.0
        %v1283 = vmax.f32 %v981, 0.0
        %v1284 = vmax.f32 %v1207, 0.0
        %v1285 = vmax.f32 %v984, 0.0
        %v1286 = vmax.f32 %v1210, 0.0
        %v1287 = vmax.f32 %v987, 0.0
        %v1288 = vmax.f32 %v1213, 0.0
        %v1289 = vmax.f32 %v990, 0.0
        %v1290 = vmax.f32 %v1216, 0.0
        %v1291 = vmax.f32 %v993, 0.0
        %v1292 = vmax.f32 %v1219, 0.0
        %v1293 = vmax.f32 %v996, 0.0
        %v1294 = vmax.f32 %v1222, 0.0
        %v1295 = vmax.f32 %v999, 0.0
        %v1296 = vmax.f32 %v1225, 0.0
        %v1297 = vmax.f32 %v1002, 0.0
        %v1298 = vmax.f32 %v1228, 0.0
        %v1299 = vmax.f32 %v1005, 0.0
        %v1300 = vmax.f32 %v1231, 0.0
        %v1301 = vmax.f32 %v1008, 0.0
        %v1302 = vmax.f32 %v1234, 0.0
        %v1303 = vmax.f32 %v1011, 0.0
        %v1304 = vmax.f32 %v1237, 0.0
        %v1305 = vmax.f32 %v1014, 0.0
        %v1306 = vmax.f32 %v1240, 0.0
        %v1307 = vmax.f32 %v1017, 0.0
        %v1308 = vmax.f32 %v1243, 0.0
        %v1309 = vld [vmem:[#allocation8] sm:$0xff]
        %v1310 = vld [vmem:[#allocation8 + $0x8] sm:$0xff]
        %v1311 = vld [vmem:[#allocation8 + $0x10] sm:$0xff]
        %v1312 = vld [vmem:[#allocation8 + $0x18] sm:$0xff]
        %v1313 = vld [vmem:[#allocation8 + $0x20] sm:$0xff]
        %v1314 = vld [vmem:[#allocation8 + $0x28] sm:$0xff]
        %v1315 = vld [vmem:[#allocation8 + $0x30] sm:$0xff]
        %v1316 = vld [vmem:[#allocation8 + $0x38] sm:$0xff]
        %v1317 = vld [vmem:[#allocation8 + $0x40] sm:$0xff]
        %v1318 = vld [vmem:[#allocation8 + $0x48] sm:$0xff]
        %v1319 = vld [vmem:[#allocation8 + $0x50] sm:$0xff]
        %v1320 = vld [vmem:[#allocation8 + $0x58] sm:$0xff]
        %v1321 = vld [vmem:[#allocation8 + $0x60] sm:$0xff]
        %v1322 = vld [vmem:[#allocation8 + $0x68] sm:$0xff]
        %v1323 = vld [vmem:[#allocation8 + $0x70] sm:$0xff]
        %v1324 = vld [vmem:[#allocation8 + $0x78] sm:$0xff]
        %v1325 = vld [vmem:[#allocation8 + $0x80] sm:$0xff]
        %v1326 = vld [vmem:[#allocation8 + $0x88] sm:$0xff]
        %v1327 = vld [vmem:[#allocation8 + $0x90] sm:$0xff]
        %v1328 = vld [vmem:[#allocation8 + $0x98] sm:$0xff]
        %v1329 = vld [vmem:[#allocation8 + $0xa0] sm:$0xff]
        %v1330 = vld [vmem:[#allocation8 + $0xa8] sm:$0xff]
        %v1331 = vld [vmem:[#allocation8 + $0xb0] sm:$0xff]
        %v1332 = vld [vmem:[#allocation8 + $0xb8] sm:$0xff]
        %v1333 = vld [vmem:[#allocation8 + $0xc0] sm:$0xff]
        %v1334 = vld [vmem:[#allocation8 + $0xc8] sm:$0xff]
        %v1335 = vld [vmem:[#allocation8 + $0xd0] sm:$0xff]
        %v1336 = vld [vmem:[#allocation8 + $0xd8] sm:$0xff]
        %v1337 = vld [vmem:[#allocation8 + $0xe0] sm:$0xff]
        %v1338 = vld [vmem:[#allocation8 + $0xe8] sm:$0xff]
        %v1339 = vld [vmem:[#allocation8 + $0xf0] sm:$0xff]
        %v1340 = vld [vmem:[#allocation8 + $0xf8] sm:$0xff]
        %v1341 = vld [vmem:[%s5] sm:$0x1]
        %v1343 = vperm.slane %v1341, 0
        %1345 = vmatpush.msra.mxu0 %v1324
        %1346 = vmatpush.msra.mxu0 %v1323
        %1347 = vmatpush.msra.mxu0 %v1322
        %1348 = vmatpush.msra.mxu0 %v1321
        %1349 = vmatpush.msra.mxu0 %v1320
        %1350 = vmatpush.msra.mxu0 %v1319
        %1351 = vmatpush.msra.mxu0 %v1318
        %1352 = vmatpush.msra.mxu0 %v1317
        %1353 = vmatpush.msra.mxu0 %v1316
        %1354 = vmatpush.msra.mxu0 %v1315
        %1355 = vmatpush.msra.mxu0 %v1314
        %1356 = vmatpush.msra.mxu0 %v1313
        %1357 = vmatpush.msra.mxu0 %v1312
        %1358 = vmatpush.msra.mxu0 %v1311
        %1359 = vmatpush.msra.mxu0 %v1310
        %1360 = vmatpush.msra.mxu0 %v1309
        %1361 = vmatmul.f32.gmra.mxu0 %v1245
        %v1362 = vpop.f32.mrf.mxu0
        %v1363 = vadd.f32 %v1343, %v1362
        %1364 = vmatmul.f32.gmra.mxu0 %v1247
        %v1365 = vpop.f32.mrf.mxu0
        %v1366 = vadd.f32 %v1343, %v1365
        %1367 = vmatmul.f32.gmra.mxu0 %v1249
        %v1368 = vpop.f32.mrf.mxu0
        %v1369 = vadd.f32 %v1343, %v1368
        %1370 = vmatmul.f32.gmra.mxu0 %v1251
        %v1371 = vpop.f32.mrf.mxu0
        %v1372 = vadd.f32 %v1343, %v1371
        %1373 = vmatmul.f32.gmra.mxu0 %v1253
        %v1374 = vpop.f32.mrf.mxu0
        %v1375 = vadd.f32 %v1343, %v1374
        %1376 = vmatmul.f32.gmra.mxu0 %v1255
        %v1377 = vpop.f32.mrf.mxu0
        %v1378 = vadd.f32 %v1343, %v1377
        %1379 = vmatmul.f32.gmra.mxu0 %v1257
        %v1380 = vpop.f32.mrf.mxu0
        %v1381 = vadd.f32 %v1343, %v1380
        %1382 = vmatmul.f32.gmra.mxu0 %v1259
        %v1383 = vpop.f32.mrf.mxu0
        %v1384 = vadd.f32 %v1343, %v1383
        %1385 = vmatmul.f32.gmra.mxu0 %v1261
        %v1386 = vpop.f32.mrf.mxu0
        %v1387 = vadd.f32 %v1343, %v1386
        %1388 = vmatmul.f32.gmra.mxu0 %v1263
        %v1389 = vpop.f32.mrf.mxu0
        %v1390 = vadd.f32 %v1343, %v1389
        %1391 = vmatmul.f32.gmra.mxu0 %v1265
        %v1392 = vpop.f32.mrf.mxu0
        %v1393 = vadd.f32 %v1343, %v1392
        %1394 = vmatmul.f32.gmra.mxu0 %v1267
        %v1395 = vpop.f32.mrf.mxu0
        %v1396 = vadd.f32 %v1343, %v1395
        %1397 = vmatmul.f32.gmra.mxu0 %v1269
        %v1398 = vpop.f32.mrf.mxu0
        %v1399 = vadd.f32 %v1343, %v1398
        %1400 = vmatmul.f32.gmra.mxu0 %v1271
        %v1401 = vpop.f32.mrf.mxu0
        %v1402 = vadd.f32 %v1343, %v1401
        %1403 = vmatmul.f32.gmra.mxu0 %v1273
        %v1404 = vpop.f32.mrf.mxu0
        %v1405 = vadd.f32 %v1343, %v1404
        %1406 = vmatmul.f32.gmra.mxu0 %v1275
        %v1407 = vpop.f32.mrf.mxu0
        %v1408 = vadd.f32 %v1343, %v1407
        %1409 = vmatmul.f32.gmra.mxu0 %v1277
        %v1410 = vpop.f32.mrf.mxu0
        %v1411 = vadd.f32 %v1343, %v1410
        %1412 = vmatmul.f32.gmra.mxu0 %v1279
        %v1413 = vpop.f32.mrf.mxu0
        %v1414 = vadd.f32 %v1343, %v1413
        %1415 = vmatmul.f32.gmra.mxu0 %v1281
        %v1416 = vpop.f32.mrf.mxu0
        %v1417 = vadd.f32 %v1343, %v1416
        %1418 = vmatmul.f32.gmra.mxu0 %v1283
        %v1419 = vpop.f32.mrf.mxu0
        %v1420 = vadd.f32 %v1343, %v1419
        %1421 = vmatmul.f32.gmra.mxu0 %v1285
        %v1422 = vpop.f32.mrf.mxu0
        %v1423 = vadd.f32 %v1343, %v1422
        %1424 = vmatmul.f32.gmra.mxu0 %v1287
        %v1425 = vpop.f32.mrf.mxu0
        %v1426 = vadd.f32 %v1343, %v1425
        %1427 = vmatmul.f32.gmra.mxu0 %v1289
        %v1428 = vpop.f32.mrf.mxu0
        %v1429 = vadd.f32 %v1343, %v1428
        %1430 = vmatmul.f32.gmra.mxu0 %v1291
        %v1431 = vpop.f32.mrf.mxu0
        %v1432 = vadd.f32 %v1343, %v1431
        %1433 = vmatmul.f32.gmra.mxu0 %v1293
        %v1434 = vpop.f32.mrf.mxu0
        %v1435 = vadd.f32 %v1343, %v1434
        %1436 = vmatmul.f32.gmra.mxu0 %v1295
        %v1437 = vpop.f32.mrf.mxu0
        %v1438 = vadd.f32 %v1343, %v1437
        %1439 = vmatmul.f32.gmra.mxu0 %v1297
        %v1440 = vpop.f32.mrf.mxu0
        %v1441 = vadd.f32 %v1343, %v1440
        %1442 = vmatmul.f32.gmra.mxu0 %v1299
        %v1443 = vpop.f32.mrf.mxu0
        %v1444 = vadd.f32 %v1343, %v1443
        %1445 = vmatmul.f32.gmra.mxu0 %v1301
        %v1446 = vpop.f32.mrf.mxu0
        %v1447 = vadd.f32 %v1343, %v1446
        %1448 = vmatmul.f32.gmra.mxu0 %v1303
        %v1449 = vpop.f32.mrf.mxu0
        %v1450 = vadd.f32 %v1343, %v1449
        %1451 = vmatmul.f32.gmra.mxu0 %v1305
        %v1452 = vpop.f32.mrf.mxu0
        %v1453 = vadd.f32 %v1343, %v1452
        %1454 = vmatmul.f32.gmra.mxu0 %v1307
        %v1455 = vpop.f32.mrf.mxu0
        %v1456 = vadd.f32 %v1343, %v1455
        %1457 = vdwg.mxu0
        %1458 = vmatpush.msra.mxu0 %v1340
        %1459 = vmatpush.msra.mxu0 %v1339
        %1460 = vmatpush.msra.mxu0 %v1338
        %1461 = vmatpush.msra.mxu0 %v1337
        %1462 = vmatpush.msra.mxu0 %v1336
        %1463 = vmatpush.msra.mxu0 %v1335
        %1464 = vmatpush.msra.mxu0 %v1334
        %1465 = vmatpush.msra.mxu0 %v1333
        %1466 = vmatpush.msra.mxu0 %v1332
        %1467 = vmatpush.msra.mxu0 %v1331
        %1468 = vmatpush.msra.mxu0 %v1330
        %1469 = vmatpush.msra.mxu0 %v1329
        %1470 = vmatpush.msra.mxu0 %v1328
        %1471 = vmatpush.msra.mxu0 %v1327
        %1472 = vmatpush.msra.mxu0 %v1326
        %1473 = vmatpush.msra.mxu0 %v1325
        %1474 = vmatmul.f32.gmra.mxu0 %v1246
        %v1475 = vpop.f32.mrf.mxu0
        %v1476 = vadd.f32 %v1363, %v1475
        %1477 = vmatmul.f32.gmra.mxu0 %v1248
        %v1478 = vpop.f32.mrf.mxu0
        %v1479 = vadd.f32 %v1366, %v1478
        %1480 = vmatmul.f32.gmra.mxu0 %v1250
        %v1481 = vpop.f32.mrf.mxu0
        %v1482 = vadd.f32 %v1369, %v1481
        %1483 = vmatmul.f32.gmra.mxu0 %v1252
        %v1484 = vpop.f32.mrf.mxu0
        %v1485 = vadd.f32 %v1372, %v1484
        %1486 = vmatmul.f32.gmra.mxu0 %v1254
        %v1487 = vpop.f32.mrf.mxu0
        %v1488 = vadd.f32 %v1375, %v1487
        %1489 = vmatmul.f32.gmra.mxu0 %v1256
        %v1490 = vpop.f32.mrf.mxu0
        %v1491 = vadd.f32 %v1378, %v1490
        %1492 = vmatmul.f32.gmra.mxu0 %v1258
        %v1493 = vpop.f32.mrf.mxu0
        %v1494 = vadd.f32 %v1381, %v1493
        %1495 = vmatmul.f32.gmra.mxu0 %v1260
        %v1496 = vpop.f32.mrf.mxu0
        %v1497 = vadd.f32 %v1384, %v1496
        %1498 = vmatmul.f32.gmra.mxu0 %v1262
        %v1499 = vpop.f32.mrf.mxu0
        %v1500 = vadd.f32 %v1387, %v1499
        %1501 = vmatmul.f32.gmra.mxu0 %v1264
        %v1502 = vpop.f32.mrf.mxu0
        %v1503 = vadd.f32 %v1390, %v1502
        %1504 = vmatmul.f32.gmra.mxu0 %v1266
        %v1505 = vpop.f32.mrf.mxu0
        %v1506 = vadd.f32 %v1393, %v1505
        %1507 = vmatmul.f32.gmra.mxu0 %v1268
        %v1508 = vpop.f32.mrf.mxu0
        %v1509 = vadd.f32 %v1396, %v1508
        %1510 = vmatmul.f32.gmra.mxu0 %v1270
        %v1511 = vpop.f32.mrf.mxu0
        %v1512 = vadd.f32 %v1399, %v1511
        %1513 = vmatmul.f32.gmra.mxu0 %v1272
        %v1514 = vpop.f32.mrf.mxu0
        %v1515 = vadd.f32 %v1402, %v1514
        %1516 = vmatmul.f32.gmra.mxu0 %v1274
        %v1517 = vpop.f32.mrf.mxu0
        %v1518 = vadd.f32 %v1405, %v1517
        %1519 = vmatmul.f32.gmra.mxu0 %v1276
        %v1520 = vpop.f32.mrf.mxu0
        %v1521 = vadd.f32 %v1408, %v1520
        %1522 = vmatmul.f32.gmra.mxu0 %v1278
        %v1523 = vpop.f32.mrf.mxu0
        %v1524 = vadd.f32 %v1411, %v1523
        %1525 = vmatmul.f32.gmra.mxu0 %v1280
        %v1526 = vpop.f32.mrf.mxu0
        %v1527 = vadd.f32 %v1414, %v1526
        %1528 = vmatmul.f32.gmra.mxu0 %v1282
        %v1529 = vpop.f32.mrf.mxu0
        %v1530 = vadd.f32 %v1417, %v1529
        %1531 = vmatmul.f32.gmra.mxu0 %v1284
        %v1532 = vpop.f32.mrf.mxu0
        %v1533 = vadd.f32 %v1420, %v1532
        %1534 = vmatmul.f32.gmra.mxu0 %v1286
        %v1535 = vpop.f32.mrf.mxu0
        %v1536 = vadd.f32 %v1423, %v1535
        %1537 = vmatmul.f32.gmra.mxu0 %v1288
        %v1538 = vpop.f32.mrf.mxu0
        %v1539 = vadd.f32 %v1426, %v1538
        %1540 = vmatmul.f32.gmra.mxu0 %v1290
        %v1541 = vpop.f32.mrf.mxu0
        %v1542 = vadd.f32 %v1429, %v1541
        %1543 = vmatmul.f32.gmra.mxu0 %v1292
        %v1544 = vpop.f32.mrf.mxu0
        %v1545 = vadd.f32 %v1432, %v1544
        %1546 = vmatmul.f32.gmra.mxu0 %v1294
        %v1547 = vpop.f32.mrf.mxu0
        %v1548 = vadd.f32 %v1435, %v1547
        %1549 = vmatmul.f32.gmra.mxu0 %v1296
        %v1550 = vpop.f32.mrf.mxu0
        %v1551 = vadd.f32 %v1438, %v1550
        %1552 = vmatmul.f32.gmra.mxu0 %v1298
        %v1553 = vpop.f32.mrf.mxu0
        %v1554 = vadd.f32 %v1441, %v1553
        %1555 = vmatmul.f32.gmra.mxu0 %v1300
        %v1556 = vpop.f32.mrf.mxu0
        %v1557 = vadd.f32 %v1444, %v1556
        %1558 = vmatmul.f32.gmra.mxu0 %v1302
        %v1559 = vpop.f32.mrf.mxu0
        %v1560 = vadd.f32 %v1447, %v1559
        %1561 = vmatmul.f32.gmra.mxu0 %v1304
        %v1562 = vpop.f32.mrf.mxu0
        %v1563 = vadd.f32 %v1450, %v1562
        %1564 = vmatmul.f32.gmra.mxu0 %v1306
        %v1565 = vpop.f32.mrf.mxu0
        %v1566 = vadd.f32 %v1453, %v1565
        %1567 = vmatmul.f32.gmra.mxu0 %v1308
        %v1568 = vpop.f32.mrf.mxu0
        %v1569 = vadd.f32 %v1456, %v1568
        %1570 = vdwg.mxu0
        %v1571 = vtanh.pop %v1476
        %v1572 = vtanh.pop %v1479
        %v1573 = vtanh.pop %v1482
        %v1574 = vtanh.pop %v1485
        %v1575 = vtanh.pop %v1488
        %v1576 = vtanh.pop %v1491
        %v1577 = vtanh.pop %v1494
        %v1578 = vtanh.pop %v1497
        %v1579 = vtanh.pop %v1500
        %v1580 = vtanh.pop %v1503
        %v1581 = vtanh.pop %v1506
        %v1582 = vtanh.pop %v1509
        %v1583 = vtanh.pop %v1512
        %v1584 = vtanh.pop %v1515
        %v1585 = vtanh.pop %v1518
        %v1586 = vtanh.pop %v1521
        %v1587 = vtanh.pop %v1524
        %v1588 = vtanh.pop %v1527
        %v1589 = vtanh.pop %v1530
        %v1590 = vtanh.pop %v1533
        %v1591 = vtanh.pop %v1536
        %v1592 = vtanh.pop %v1539
        %v1593 = vtanh.pop %v1542
        %v1594 = vtanh.pop %v1545
        %v1595 = vtanh.pop %v1548
        %v1596 = vtanh.pop %v1551
        %v1597 = vtanh.pop %v1554
        %v1598 = vtanh.pop %v1557
        %v1599 = vtanh.pop %v1560
        %v1600 = vtanh.pop %v1563
        %v1601 = vtanh.pop %v1566
        %v1602 = vtanh.pop %v1569
        %1603 = vst [vmem:[%s360] sm:$0xff] %v1571
        %1604 = vst [vmem:[%s360 + $0x8] sm:$0xff] %v1572
        %1605 = vst [vmem:[%s360 + $0x10] sm:$0xff] %v1573
        %1606 = vst [vmem:[%s360 + $0x18] sm:$0xff] %v1574
        %1607 = vst [vmem:[%s360 + $0x20] sm:$0xff] %v1575
        %1608 = vst [vmem:[%s360 + $0x28] sm:$0xff] %v1576
        %1609 = vst [vmem:[%s360 + $0x30] sm:$0xff] %v1577
        %1610 = vst [vmem:[%s360 + $0x38] sm:$0xff] %v1578
        %1611 = vst [vmem:[%s360 + $0x40] sm:$0xff] %v1579
        %1612 = vst [vmem:[%s360 + $0x48] sm:$0xff] %v1580
        %1613 = vst [vmem:[%s360 + $0x50] sm:$0xff] %v1581
        %1614 = vst [vmem:[%s360 + $0x58] sm:$0xff] %v1582
        %1615 = vst [vmem:[%s360 + $0x60] sm:$0xff] %v1583
        %1616 = vst [vmem:[%s360 + $0x68] sm:$0xff] %v1584
        %1617 = vst [vmem:[%s360 + $0x70] sm:$0xff] %v1585
        %1618 = vst [vmem:[%s360 + $0x78] sm:$0xff] %v1586
        %1619 = vst [vmem:[%s360 + $0x80] sm:$0xff] %v1587
        %1620 = vst [vmem:[%s360 + $0x88] sm:$0xff] %v1588
        %1621 = vst [vmem:[%s360 + $0x90] sm:$0xff] %v1589
        %1622 = vst [vmem:[%s360 + $0x98] sm:$0xff] %v1590
        %1623 = vst [vmem:[%s360 + $0xa0] sm:$0xff] %v1591
        %1624 = vst [vmem:[%s360 + $0xa8] sm:$0xff] %v1592
        %1625 = vst [vmem:[%s360 + $0xb0] sm:$0xff] %v1593
        %1626 = vst [vmem:[%s360 + $0xb8] sm:$0xff] %v1594
        %1627 = vst [vmem:[%s360 + $0xc0] sm:$0xff] %v1595
        %1628 = vst [vmem:[%s360 + $0xc8] sm:$0xff] %v1596
        %1629 = vst [vmem:[%s360 + $0xd0] sm:$0xff] %v1597
        %1630 = vst [vmem:[%s360 + $0xd8] sm:$0xff] %v1598
        %1631 = vst [vmem:[%s360 + $0xe0] sm:$0xff] %v1599
        %1632 = vst [vmem:[%s360 + $0xe8] sm:$0xff] %v1600
        %1633 = vst [vmem:[%s360 + $0xf0] sm:$0xff] %v1601
        %1634 = vst [vmem:[%s360 + $0xf8] sm:$0xff] %v1602
        %s1635 = sand.u32 %s184, 1
        %s1636 = scalar_lea.sflag [#allocation4], %s1635
        %s1637 = sand.u32 %s184, 1
        %s1638 = smul.addr %s1637, 256
        %s1639 = scalar_lea.vmem [#allocation11], %s1638
        // Predicated region
        $region69: #{tpu_custom_call.1} parent=47 // pred_check
          %p1640 = pneg %p194
        $region70: #{tpu_custom_call.1} parent=47 // pred_check_branch
          %1642 = sbr.rel (%p1640) target = $region72
        $region71: #{tpu_custom_call.1} parent=47 // pred_region
          %s1643 = smul.u32 32, %s24
          %1645 = vsyncadd %s1636, 0
          %s1646 = smul.addr %s1643, 8
          %s1647 = scalar_lea.hbm %s7, %s1646
          %s1648 = sshll.u32 %s1639, 4
          %s1649 = int_to_ptr.vmem [resolvable:$true] %s1648
          %s1650 = sshll.u32 %s1647, 4
          %s1651 = int_to_ptr.hbm [resolvable:$true] %s1650
          %1656 = dma.vmem_to_hbm [thread:$0]  %s1649, 4096, %s1651, %s1636, 128, 128, 8
        $region72: #{tpu_custom_call.1} parent=47 // pred_fallthru
          _
      $region48: #{tpu_custom_call.1} parent=5 // pred_fallthru
        _
      %p1657 = scmp.le.s32.totalorder 2, %s19
      // Predicated region
      $region73: #{tpu_custom_call.1} parent=5 // pred_check
        %p1658 = pneg %p1657
      $region74: #{tpu_custom_call.1} parent=5 // pred_check_branch
        %1660 = sbr.rel (%p1658) target = $region76
      $region75: #{tpu_custom_call.1} parent=5 // pred_region
        %s1661 = ssub.s32 %s19, 2
        // Predicated region
        $region77: #{tpu_custom_call.1} parent=75 // pred_check
          %p1662 = pneg %p200
        $region78: #{tpu_custom_call.1} parent=75 // pred_check_branch
          %1664 = sbr.rel (%p1662) target = $region80
        $region79: #{tpu_custom_call.1} parent=75 // pred_region
          %s1665 = sand.u32 %s185, 1
          %s1666 = scalar_lea.sflag [#allocation4], %s1665
          %s1667 = sand.u32 %s185, 1
          %s1668 = smul.addr %s1667, 256
          %s1669 = scalar_lea.vmem [#allocation11], %s1668
          %1671 = dma.done %s1666, 4096
        $region80: #{tpu_custom_call.1} parent=75 // pred_fallthru
          _
      $region76: #{tpu_custom_call.1} parent=5 // pred_fallthru
        _
    $region6: #{tpu_custom_call.1} parent=1 // loop_footer
      %s23 = sadd.s32 1, %s19
    $region7: #{tpu_custom_call.1} parent=1 // loop_footer_branch
      %18 = sbr.rel target = $region3
    $region8: #{tpu_custom_call.1} parent=1 // loop_exit
      _
    %1672 = vsyncpa [#allocation3], 1
    %s1673 = scalar_lea.sflag [#allocation3], 1
    %1674 = vsyncpa %s1673, 1
    %1675 = vsyncpa [#allocation6], 1
    %1676 = vsyncpa [#allocation9], 1
    %1677 = vsyncpa [#allocation4], 1
    %s1678 = scalar_lea.sflag [#allocation4], 1
    %1679 = vsyncpa %s1678, 1

</llo_original>
